<compile_context>
chip_gen: v7x
topology: tpu7x:2x2x1
jax: 0.10.0
libtpu: 0.0.40
codegen_flags: <defaults>
</compile_context>

<pallas_src>
import jax
import jax.numpy as jnp
from jax.experimental import pallas as pl
from jax.experimental.pallas import tpu as pltpu

TN_DEFAULT = 8192              # point-axis (lane) tile; sweep 4096-16384
TARGET_BYTES_PER_STEP = 2 << 20  # aim for ~2 MiB of HBM traffic per grid step
MAX_COLS_PER_STEP = 16384        # cap NB*TN so blocks + temporaries stay small in VMEM


# --------------------------------------------------------------------------
# Fused kernel: relu(BN(conv1(x))) -> relu(BN(conv2(.)))  on an (NB, C, TN) slab
# --------------------------------------------------------------------------
def _spatial_mlp_kernel(x_ref, w1_ref, b1_ref, w2_ref, b2_ref, o_ref):
    w1 = w1_ref[...]          # (C1, Cin) f32
    b1 = b1_ref[...]          # (C1, 1)   f32
    w2 = w2_ref[...]          # (C2, C1)  bf16 (pre-cast in wrapper -> bf16 DMA)
    b2 = b2_ref[...]          # (C2, 1)   f32

    nb, cin, _ = x_ref.shape
    for ib in range(nb):                              # static, fully unrolled (NB small)
        x = x_ref[ib].astype(jnp.float32)             # (Cin, TN)

        # Layer 1: Conv1d(Cin->C1, 1) + BN + ReLU.  Cin is tiny (3), so an
        # unrolled rank-1 accumulation on the VPU beats a K=3 MXU matmul.
        h = b1                                        # (C1, 1) broadcasts to (C1, TN)
        for k in range(cin):                          # static, fully unrolled
            h = h + w1[:, k:k + 1] * x[k:k + 1, :]
        # bf16 feed for the MXU (native format on v5e/v6e/v7x); accum stays f32.
        h = jnp.maximum(h, 0.0).astype(jnp.bfloat16)  # (C1, TN)

        # Layer 2: Conv1d(C1->C2, 1) + BN + ReLU on the MXU, f32 accumulation.
        y = jnp.dot(w2, h, preferred_element_type=jnp.float32) + b2
        o_ref[ib] = jnp.maximum(y, 0.0).astype(o_ref.dtype)


# --------------------------------------------------------------------------
# Tiling heuristic: hit ~TARGET_BYTES_PER_STEP of HBM traffic per grid step
# --------------------------------------------------------------------------
def _choose_tiling(b, n, cin, c2, in_itemsize, out_itemsize, tn):
    bytes_per_col = cin * in_itemsize + c2 * out_itemsize   # HBM bytes per point column
    target_cols = max(1, TARGET_BYTES_PER_STEP // bytes_per_col)
    target_cols = min(target_cols, MAX_COLS_PER_STEP)

    # Full-extent block for small n (never pads past the array, no 128-mult needed).
    if n <= tn:
        tn = n

    # Block several batch rows per step when n alone can't reach the traffic target.
    nb = 1
    if tn < target_cols:
        nb = max(1, min(b, -(-target_cols // tn)))           # ceil div

    # Avoid a degenerate 1-step grid (v7x has 2 TensorCores): split n when possible.
    if pl.cdiv(b, nb) * pl.cdiv(n, tn) == 1 and n >= 256:
        tn = 128 * (-(-((n + 1) // 2) // 128))                # ~n/2, 128-aligned
    return nb, tn


def spatial_descriptor_forward(centers, w1, b1, w2, b2, *, tn=TN_DEFAULT,
                               out_dtype=None):
    """centers: (b, Cin, n) NCW  ->  (b, C2, n) NCW, fused 2-layer pointwise MLP.

    out_dtype: output dtype (default = centers.dtype).  Pass jnp.bfloat16 to
    nearly halve HBM traffic (the output dominates bytes 21:1); accumulation
    is f32 regardless.
    """
    b, cin, n = centers.shape
    c1 = w1.shape[0]
    c2 = w2.shape[0]
    out_dtype = centers.dtype if out_dtype is None else jnp.dtype(out_dtype)

    in_itemsize = jnp.dtype(centers.dtype).itemsize
    out_itemsize = jnp.dtype(out_dtype).itemsize
    nb, tn = _choose_tiling(b, n, cin, c2, in_itemsize, out_itemsize, tn)
    grid = (pl.cdiv(b, nb), pl.cdiv(n, tn))

    cost = pl.CostEstimate(
        flops=2 * b * n * (cin * c1 + c1 * c2),
        transcendentals=0,
        bytes_accessed=b * n * (cin * in_itemsize + c2 * out_itemsize)
                       + 4 * (c1 * cin + c1 + c2 * c1 + c2),
    )

    return pl.pallas_call(
        _spatial_mlp_kernel,
        out_shape=jax.ShapeDtypeStruct((b, c2, n), out_dtype),
        grid_spec=pltpu.PrefetchScalarGridSpec(
            num_scalar_prefetch=0,
            grid=grid,
            in_specs=[
                pl.BlockSpec((nb, cin, tn), lambda i, j: (i, 0, j)),
                pl.BlockSpec((c1, cin), lambda i, j: (0, 0)),
                pl.BlockSpec((c1, 1), lambda i, j: (0, 0)),
                pl.BlockSpec((c2, c1), lambda i, j: (0, 0)),
                pl.BlockSpec((c2, 1), lambda i, j: (0, 0)),
            ],
            out_specs=pl.BlockSpec((nb, c2, tn), lambda i, j: (i, 0, j)),
        ),
        compiler_params=pltpu.CompilerParams(
            dimension_semantics=("parallel", "parallel")),
        cost_estimate=cost,
    )(centers,
      w1.astype(jnp.float32), b1.astype(jnp.float32),
      w2.astype(jnp.bfloat16),          # bf16 weight DMA + MXU-native operand
      b2.astype(jnp.float32))


# --------------------------------------------------------------------------
# Parameter setup (deterministic, conv+BN folded in eval mode)
# --------------------------------------------------------------------------
def _fold_conv_bn(w, bias, gamma, beta, mean, var, eps=1e-5):
    # w: (Cout, Cin) is the kernel-size-1 conv weight with the trailing 1 squeezed.
    scale = gamma / jnp.sqrt(var + eps)                      # (Cout,)
    w_f = (w * scale[:, None]).astype(jnp.float32)           # (Cout, Cin)
    b_f = ((bias - mean) * scale + beta).astype(jnp.float32)
    return w_f, b_f.reshape(-1, 1)                           # (Cout, Cin), (Cout, 1)


def _conv_params(key, cout, cin):
    # PyTorch Conv1d default init: U(-1/sqrt(fan_in), 1/sqrt(fan_in))
    kw, kb = jax.random.split(key)
    bound = 1.0 / (cin ** 0.5)
    w = jax.random.uniform(kw, (cout, cin), jnp.float32, -bound, bound)
    b = jax.random.uniform(kb, (cout,), jnp.float32, -bound, bound)
    return w, b


def _bn_params(cout):
    # eval-mode BN with default running stats (gamma=1, beta=0, mean=0, var=1)
    return (jnp.ones((cout,), jnp.float32), jnp.zeros((cout,), jnp.float32),
            jnp.zeros((cout,), jnp.float32), jnp.ones((cout,), jnp.float32))


class SpatialDescriptor:
    def __init__(self, key, in_channel=3, hidden=64, out_channel=64):
        k1, k2 = jax.random.split(key)
        w1, b1 = _conv_params(k1, hidden, in_channel)
        w2, b2 = _conv_params(k2, out_channel, hidden)
        self.w1, self.b1 = _fold_conv_bn(w1, b1, *_bn_params(hidden))
        self.w2, self.b2 = _fold_conv_bn(w2, b2, *_bn_params(out_channel))

    def __call__(self, centers, out_dtype=None):
        return spatial_descriptor_forward(centers, self.w1, self.b1,
                                          self.w2, self.b2, out_dtype=out_dtype)


# --------------------------------------------------------------------------
# Plain-JAX reference for correctness checking (pure f32)
# --------------------------------------------------------------------------
def _ref_forward(centers, w1, b1, w2, b2):
    x = centers.astype(jnp.float32)
    h = jnp.maximum(jnp.einsum("oc,bcn->bon", w1, x) + b1[None], 0.0)
    y = jnp.maximum(jnp.einsum("oc,bcn->bon", w2, h) + b2[None], 0.0)
    return y


if __name__ == "__main__":
    key = jax.random.PRNGKey(0)
    k_params, k_x = jax.random.split(key)

    module = SpatialDescriptor(k_params)

    # 1) Small n: batch-blocked (NB=2) with the degenerate grid split along n.
    b, n = 2, 300
    centers = jax.random.normal(k_x, (b, 3, n), jnp.float32)
    out = module(centers)
    jax.block_until_ready(out)
    assert out.shape == (b, 64, n), out.shape
    assert out.dtype == jnp.float32
    ref = _ref_forward(centers, module.w1, module.b1, module.w2, module.b2)
    # bf16 MXU operands (f32 accumulation) -> loose tolerance vs the pure-f32 ref.
    assert jnp.allclose(out, ref, atol=5e-2, rtol=5e-2)

    # 2) Medium n: multi-tile grid with a partial edge tile along n.
    n2 = 3000
    centers2 = jax.random.normal(jax.random.PRNGKey(1), (b, 3, n2), jnp.float32)
    out2 = module(centers2)
    jax.block_until_ready(out2)
    assert out2.shape == (b, 64, n2), out2.shape
    ref2 = _ref_forward(centers2, module.w1, module.b1, module.w2, module.b2)
    assert jnp.allclose(out2, ref2, atol=5e-2, rtol=5e-2)

    # 3) Larger n: exercises the TN=8192 default tile (NB=1) with a partial edge.
    n3 = 9000
    centers3 = jax.random.normal(jax.random.PRNGKey(2), (b, 3, n3), jnp.float32)
    out3 = module(centers3)
    jax.block_until_ready(out3)
    assert out3.shape == (b, 64, n3), out3.shape
    ref3 = _ref_forward(centers3, module.w1, module.b1, module.w2, module.b2)
    assert jnp.allclose(out3, ref3, atol=5e-2, rtol=5e-2)

    # 4) bf16 output (recommended bandwidth path): accuracy-checked vs f32 ref.
    out_bf16 = module(centers, out_dtype=jnp.bfloat16)
    jax.block_until_ready(out_bf16)
    assert out_bf16.shape == (b, 64, n)
    assert out_bf16.dtype == jnp.bfloat16
    assert jnp.allclose(out_bf16.astype(jnp.float32), ref, atol=1e-1, rtol=1e-1)

    # 5) bf16 input (dtype-polymorphic): output follows input dtype by default.
    out_bf16_in = module(centers.astype(jnp.bfloat16))
    jax.block_until_ready(out_bf16_in)
    assert out_bf16_in.shape == (b, 64, n)
    assert out_bf16_in.dtype == jnp.bfloat16
    assert jnp.allclose(out_bf16_in.astype(jnp.float32), ref, atol=1e-1, rtol=1e-1)

    print("KERNEL_OK")
</pallas_src>

<mosaic_0001>
module attributes {stable_mosaic.version = 11 : i64} {
  func.func @_spatial_mlp_kernel(%arg0: i32, %arg1: i32, %arg2: memref<2x3x256xf32, #tpu.memory_space<vmem>>, %arg3: memref<64x3xf32, #tpu.memory_space<vmem>>, %arg4: memref<64x1xf32, #tpu.memory_space<vmem>>, %arg5: memref<64x64xbf16, #tpu.memory_space<vmem>>, %arg6: memref<64x1xf32, #tpu.memory_space<vmem>>, %arg7: memref<2x64x256xf32, #tpu.memory_space<vmem>>) attributes {dimension_semantics = [#tpu.dimension_semantics<parallel>, #tpu.dimension_semantics<parallel>], iteration_bounds = array<i64: 1, 2>, scalar_prefetch = 0 : i64, scratch_operands = 0 : i64, tpu.core_type = #tpu.core_type<tc>, window_params = [{transform_indices = @transform_0, window_bounds = array<i64: 2, 3, 256>}, {pipeline_mode = #tpu.pipeline_mode<synchronous>, transform_indices = @transform_1, window_bounds = array<i64: 64, 3>}, {pipeline_mode = #tpu.pipeline_mode<synchronous>, transform_indices = @transform_2, window_bounds = array<i64: 64, 1>}, {pipeline_mode = #tpu.pipeline_mode<synchronous>, transform_indices = @transform_3, window_bounds = array<i64: 64, 64>}, {pipeline_mode = #tpu.pipeline_mode<synchronous>, transform_indices = @transform_4, window_bounds = array<i64: 64, 1>}, {transform_indices = @transform_5, window_bounds = array<i64: 2, 64, 256>}]} {
    %c0 = arith.constant 0 : index
    %c0_0 = arith.constant 0 : index
    %0 = vector.load %arg3[%c0, %c0_0] : memref<64x3xf32, #tpu.memory_space<vmem>>, vector<64x3xf32>
    %c0_1 = arith.constant 0 : index
    %c0_2 = arith.constant 0 : index
    %1 = vector.load %arg4[%c0_1, %c0_2] : memref<64x1xf32, #tpu.memory_space<vmem>>, vector<64x1xf32>
    %c0_3 = arith.constant 0 : index
    %c0_4 = arith.constant 0 : index
    %2 = vector.load %arg5[%c0_3, %c0_4] : memref<64x64xbf16, #tpu.memory_space<vmem>>, vector<64x64xbf16>
    %c0_5 = arith.constant 0 : index
    %c0_6 = arith.constant 0 : index
    %3 = vector.load %arg6[%c0_5, %c0_6] : memref<64x1xf32, #tpu.memory_space<vmem>>, vector<64x1xf32>
    %c0_7 = arith.constant 0 : index
    %c0_8 = arith.constant 0 : index
    %c0_9 = arith.constant 0 : index
    %4 = vector.load %arg2[%c0_7, %c0_8, %c0_9] : memref<2x3x256xf32, #tpu.memory_space<vmem>>, vector<1x3x256xf32>
    %5 = vector.shape_cast %4 : vector<1x3x256xf32> to vector<3x256xf32>
    %6 = vector.extract_strided_slice %0 {offsets = [0, 0], sizes = [64, 1], strides = [1, 1]} : vector<64x3xf32> to vector<64x1xf32>
    %7 = vector.extract_strided_slice %5 {offsets = [0, 0], sizes = [1, 256], strides = [1, 1]} : vector<3x256xf32> to vector<1x256xf32>
    %8 = vector.broadcast %6 : vector<64x1xf32> to vector<64x256xf32>
    %9 = vector.broadcast %7 : vector<1x256xf32> to vector<64x256xf32>
    %10 = arith.mulf %8, %9 : vector<64x256xf32>
    %11 = vector.broadcast %1 : vector<64x1xf32> to vector<64x256xf32>
    %12 = arith.addf %11, %10 : vector<64x256xf32>
    %13 = vector.extract_strided_slice %0 {offsets = [0, 1], sizes = [64, 1], strides = [1, 1]} : vector<64x3xf32> to vector<64x1xf32>
    %14 = vector.extract_strided_slice %5 {offsets = [1, 0], sizes = [1, 256], strides = [1, 1]} : vector<3x256xf32> to vector<1x256xf32>
    %15 = vector.broadcast %13 : vector<64x1xf32> to vector<64x256xf32>
    %16 = vector.broadcast %14 : vector<1x256xf32> to vector<64x256xf32>
    %17 = arith.mulf %15, %16 : vector<64x256xf32>
    %18 = arith.addf %12, %17 : vector<64x256xf32>
    %19 = vector.extract_strided_slice %0 {offsets = [0, 2], sizes = [64, 1], strides = [1, 1]} : vector<64x3xf32> to vector<64x1xf32>
    %20 = vector.extract_strided_slice %5 {offsets = [2, 0], sizes = [1, 256], strides = [1, 1]} : vector<3x256xf32> to vector<1x256xf32>
    %21 = vector.broadcast %19 : vector<64x1xf32> to vector<64x256xf32>
    %22 = vector.broadcast %20 : vector<1x256xf32> to vector<64x256xf32>
    %23 = arith.mulf %21, %22 : vector<64x256xf32>
    %24 = arith.addf %18, %23 : vector<64x256xf32>
    %cst = arith.constant 0.000000e+00 : f32
    %25 = vector.broadcast %cst : f32 to vector<64x256xf32>
    %26 = arith.maximumf %24, %25 : vector<64x256xf32>
    %27 = arith.truncf %26 : vector<64x256xf32> to vector<64x256xbf16>
    %cst_10 = arith.constant dense<0.000000e+00> : vector<64x256xf32>
    %28 = tpu.matmul %2, %27, %cst_10 {dimension_numbers = #tpu.dot_dimension_numbers<[1], [0], [0], [1], [0, 0, 1, 1], [], []>} : vector<64x64xbf16>, vector<64x256xbf16>, vector<64x256xf32> -> vector<64x256xf32>
    %29 = vector.broadcast %3 : vector<64x1xf32> to vector<64x256xf32>
    %30 = arith.addf %28, %29 : vector<64x256xf32>
    %cst_11 = arith.constant 0.000000e+00 : f32
    %31 = vector.broadcast %cst_11 : f32 to vector<64x256xf32>
    %32 = arith.maximumf %30, %31 : vector<64x256xf32>
    %c0_12 = arith.constant 0 : index
    %c0_13 = arith.constant 0 : index
    %c0_14 = arith.constant 0 : index
    %33 = vector.load %arg7[%c0_12, %c0_13, %c0_14] : memref<2x64x256xf32, #tpu.memory_space<vmem>>, vector<1x64x256xf32>
    %34 = vector.shape_cast %33 : vector<1x64x256xf32> to vector<64x256xf32>
    %35 = vector.shape_cast %32 : vector<64x256xf32> to vector<1x64x256xf32>
    tpu.vector_store %arg7[%c0_12, %c0_13, %c0_14], %35 {strides = array<i32>} : memref<2x64x256xf32, #tpu.memory_space<vmem>>, vector<1x64x256xf32>,
    %c1 = arith.constant 1 : index
    %c0_15 = arith.constant 0 : index
    %c0_16 = arith.constant 0 : index
    %36 = vector.load %arg2[%c1, %c0_15, %c0_16] : memref<2x3x256xf32, #tpu.memory_space<vmem>>, vector<1x3x256xf32>
    %37 = vector.shape_cast %36 : vector<1x3x256xf32> to vector<3x256xf32>
    %38 = vector.extract_strided_slice %0 {offsets = [0, 0], sizes = [64, 1], strides = [1, 1]} : vector<64x3xf32> to vector<64x1xf32>
    %39 = vector.extract_strided_slice %37 {offsets = [0, 0], sizes = [1, 256], strides = [1, 1]} : vector<3x256xf32> to vector<1x256xf32>
    %40 = vector.broadcast %38 : vector<64x1xf32> to vector<64x256xf32>
    %41 = vector.broadcast %39 : vector<1x256xf32> to vector<64x256xf32>
    %42 = arith.mulf %40, %41 : vector<64x256xf32>
    %43 = vector.broadcast %1 : vector<64x1xf32> to vector<64x256xf32>
    %44 = arith.addf %43, %42 : vector<64x256xf32>
    %45 = vector.extract_strided_slice %0 {offsets = [0, 1], sizes = [64, 1], strides = [1, 1]} : vector<64x3xf32> to vector<64x1xf32>
    %46 = vector.extract_strided_slice %37 {offsets = [1, 0], sizes = [1, 256], strides = [1, 1]} : vector<3x256xf32> to vector<1x256xf32>
    %47 = vector.broadcast %45 : vector<64x1xf32> to vector<64x256xf32>
    %48 = vector.broadcast %46 : vector<1x256xf32> to vector<64x256xf32>
    %49 = arith.mulf %47, %48 : vector<64x256xf32>
    %50 = arith.addf %44, %49 : vector<64x256xf32>
    %51 = vector.extract_strided_slice %0 {offsets = [0, 2], sizes = [64, 1], strides = [1, 1]} : vector<64x3xf32> to vector<64x1xf32>
    %52 = vector.extract_strided_slice %37 {offsets = [2, 0], sizes = [1, 256], strides = [1, 1]} : vector<3x256xf32> to vector<1x256xf32>
    %53 = vector.broadcast %51 : vector<64x1xf32> to vector<64x256xf32>
    %54 = vector.broadcast %52 : vector<1x256xf32> to vector<64x256xf32>
    %55 = arith.mulf %53, %54 : vector<64x256xf32>
    %56 = arith.addf %50, %55 : vector<64x256xf32>
    %cst_17 = arith.constant 0.000000e+00 : f32
    %57 = vector.broadcast %cst_17 : f32 to vector<64x256xf32>
    %58 = arith.maximumf %56, %57 : vector<64x256xf32>
    %59 = arith.truncf %58 : vector<64x256xf32> to vector<64x256xbf16>
    %cst_18 = arith.constant dense<0.000000e+00> : vector<64x256xf32>
    %60 = tpu.matmul %2, %59, %cst_18 {dimension_numbers = #tpu.dot_dimension_numbers<[1], [0], [0], [1], [0, 0, 1, 1], [], []>} : vector<64x64xbf16>, vector<64x256xbf16>, vector<64x256xf32> -> vector<64x256xf32>
    %61 = vector.broadcast %3 : vector<64x1xf32> to vector<64x256xf32>
    %62 = arith.addf %60, %61 : vector<64x256xf32>
    %cst_19 = arith.constant 0.000000e+00 : f32
    %63 = vector.broadcast %cst_19 : f32 to vector<64x256xf32>
    %64 = arith.maximumf %62, %63 : vector<64x256xf32>
    %c1_20 = arith.constant 1 : index
    %c0_21 = arith.constant 0 : index
    %c0_22 = arith.constant 0 : index
    %65 = vector.load %arg7[%c1_20, %c0_21, %c0_22] : memref<2x64x256xf32, #tpu.memory_space<vmem>>, vector<1x64x256xf32>
    %66 = vector.shape_cast %65 : vector<1x64x256xf32> to vector<64x256xf32>
    %67 = vector.shape_cast %64 : vector<64x256xf32> to vector<1x64x256xf32>
    tpu.vector_store %arg7[%c1_20, %c0_21, %c0_22], %67 {strides = array<i32>} : memref<2x64x256xf32, #tpu.memory_space<vmem>>, vector<1x64x256xf32>,
    return
  }
  func.func @transform_0(%arg0: i32, %arg1: i32) -> (i32, i32, i32) {
    %c0_i32 = arith.constant 0 : i32
    %c0_i32_0 = arith.constant 0 : i32
    return %arg0, %c0_i32, %arg1 : i32, i32, i32
  }
  func.func @transform_1(%arg0: i32, %arg1: i32) -> (i32, i32) {
    %c0_i32 = arith.constant 0 : i32
    %c0_i32_0 = arith.constant 0 : i32
    %c0_i32_1 = arith.constant 0 : i32
    return %c0_i32, %c0_i32_0 : i32, i32
  }
  func.func @transform_2(%arg0: i32, %arg1: i32) -> (i32, i32) {
    %c0_i32 = arith.constant 0 : i32
    %c0_i32_0 = arith.constant 0 : i32
    %c0_i32_1 = arith.constant 0 : i32
    return %c0_i32, %c0_i32_0 : i32, i32
  }
  func.func @transform_3(%arg0: i32, %arg1: i32) -> (i32, i32) {
    %c0_i32 = arith.constant 0 : i32
    %c0_i32_0 = arith.constant 0 : i32
    %c0_i32_1 = arith.constant 0 : i32
    return %c0_i32, %c0_i32_0 : i32, i32
  }
  func.func @transform_4(%arg0: i32, %arg1: i32) -> (i32, i32) {
    %c0_i32 = arith.constant 0 : i32
    %c0_i32_0 = arith.constant 0 : i32
    %c0_i32_1 = arith.constant 0 : i32
    return %c0_i32, %c0_i32_0 : i32, i32
  }
  func.func @transform_5(%arg0: i32, %arg1: i32) -> (i32, i32, i32) {
    %c0_i32 = arith.constant 0 : i32
    %c0_i32_0 = arith.constant 0 : i32
    return %arg0, %c0_i32, %arg1 : i32, i32, i32
  }
}

</mosaic_0001>

<llo_original>
// kernel: tpu_custom_call.1
$region0: #{tpu_custom_call.1}
  #allocation0 [shape = 'u32[]', space=smem, size = 0x4, offset = 0x4, fixed_abs, tag = 'smem constant byte address 0x4 - core index']
  #allocation1 [shape = 'u32[144,128]{1,0:T(1,128)}', space=vmem, size = 0x12000, scoped, tag = 'internal scratch']
  %s0 = inlined_call_operand.vmem [shape: f32[2,3,300], index: 0, kind: input, shape index: {}]
  %s1 = inlined_call_operand.vmem [shape: f32[64,3], index: 1, kind: input, shape index: {}]
  %s2 = inlined_call_operand.vmem [shape: f32[64,1], index: 2, kind: input, shape index: {}]
  %s3 = inlined_call_operand.vmem [shape: bf16[64,64], index: 3, kind: input, shape index: {}]
  %s4 = inlined_call_operand.vmem [shape: f32[64,1], index: 4, kind: input, shape index: {}]
  %s5 = inlined_call_operand.hbm [shape: f32[2,64,300], index: 5, kind: output, shape index: {}]
  %s6 = sld [smem:[#allocation0]]
  $region119: #{tpu_custom_call.1} parent=0
    _
  %s8 = ssub.s32 1, %s6
  %s9 = scalar_select 0, %s8, %s6
  $region1: #{tpu_custom_call.1} parent=0
    #allocation2 [shape = 'u8[16384]{0}', space=vmem, size = 0x4000, scoped, tag = 'input window, operand 0']
    #allocation3 [shape = 'u8[262144]{0}', space=vmem, size = 0x40000, scoped, tag = 'output window, operand 0']
    #allocation4 [shape = 's32[2]{0}', space=sflag, size = 0x8, scoped, tag = 'scoped memory for tpu_custom_call.1']
    %10 = vsyncpa [#allocation4], 0
    %s11 = scalar_lea.sflag [#allocation4], 1
    %12 = vsyncpa %s11, 0
    loop: start=0, step=1, limit=4
    $region2: #{tpu_custom_call.1} parent=1 // loop_pre_header
      _
    $region3: #{tpu_custom_call.1} parent=1 // loop_header
      %s14 = sphi 0, %s18
      %p15 = scmp.ge.s32.totalorder %s14, 4
      %s21 = sphi 0, %s33
      %s22 = sphi 0, %s29
      %s23 = sphi 0, %s21
      %s24 = sphi 0, %s22
      %s25 = sphi 0, %s23
      %s26 = sphi 0, %s24
      %s38 = sphi 0, %s40
      %s41 = sphi 0, %s38
      %s42 = sphi 0, %s41
      %s58 = sphi 0, %s42
      %s62 = sphi 0, %s62
      %s64 = sphi 0, %s62
      %s65 = sphi 0, %s64
      %s79 = sphi 0, %s65
      %s83 = sphi 0, %s83
      %s85 = sphi 0, %s83
      %s86 = sphi 0, %s85
      %s100 = sphi 0, %s86
      %s104 = sphi 0, %s104
      %s106 = sphi 0, %s104
      %s107 = sphi 0, %s106
      %s121 = sphi 0, %s107
      %s125 = sphi 0, %s125
      %s127 = sphi 0, %s125
      %s128 = sphi 0, %s127
      %s142 = sphi 0, %s128
      %s150 = sphi 0, %s152
      %s153 = sphi 0, %s150
      %s154 = sphi 0, %s153
      %s170 = sphi 0, %s154
    $region4: #{tpu_custom_call.1} parent=1 // loop_header_branch
      %17 = sbr.rel (%p15) target = $region8
    $region5: #{tpu_custom_call.1} parent=1 // loop_body
      %s19 = ssub.s32 %s14, 1
      %s20 = ssub.s32 %s14, 2
      %s27 = sadd.s32 1, %s22
      %p28 = scmp.ge.s32.totalorder %s27, 2
      %s29 = scalar_select %p28, 0, %s27
      %s30 = sadd.s32 1, %s21
      %s31 = scalar_select %p28, %s30, %s21
      %p32 = scmp.ge.s32.totalorder %s31, 1
      %s33 = scalar_select %p32, 0, %s31
      %s34 = ssub.s32 %s21, %s33
      %s35 = ssub.s32 %s22, %s29
      %s36 = sor.u32 %s34, %s35
      %p37 = scmp.eq.s32.totalorder %s36, 0
      %s39 = sadd.s32 %s38, 1
      %s40 = scalar_select %p37, %s38, %s39
      %p43 = pneg %p37
      %p44 = scmp.eq.s32.totalorder %s14, 1
      %p45 = por %p43, %p44
      %p46 = scmp.ne.s32.totalorder %s38, %s41
      %p47 = scmp.eq.s32.totalorder %s14, 0
      %p48 = por %p46, %p47
      %p49 = scmp.ne.s32.totalorder %s38, %s41
      %p50 = scmp.eq.s32.totalorder %s19, 1
      %p51 = por %p49, %p50
      %p52 = scmp.ne.s32.totalorder %s41, %s42
      %p53 = scmp.eq.s32.totalorder %s19, 0
      %p54 = por %p52, %p53
      %p55 = scmp.ne.s32.totalorder %s41, %s42
      %p56 = scmp.eq.s32.totalorder %s20, 1
      %p57 = por %p55, %p56
      %p59 = scmp.ne.s32.totalorder %s42, %s58
      %p60 = scmp.eq.s32.totalorder %s20, 0
      %p61 = por %p59, %p60
      %s63 = sadd.s32 %s62, 1
      %p66 = scmp.eq.s32.totalorder %s14, 1
      %p67 = scmp.ne.s32.totalorder %s62, %s64
      %p68 = scmp.eq.s32.totalorder %s14, 0
      %p69 = por %p67, %p68
      %p70 = scmp.ne.s32.totalorder %s62, %s64
      %p71 = scmp.eq.s32.totalorder %s19, 1
      %p72 = por %p70, %p71
      %p73 = scmp.ne.s32.totalorder %s64, %s65
      %p74 = scmp.eq.s32.totalorder %s19, 0
      %p75 = por %p73, %p74
      %p76 = scmp.ne.s32.totalorder %s64, %s65
      %p77 = scmp.eq.s32.totalorder %s20, 1
      %p78 = por %p76, %p77
      %p80 = scmp.ne.s32.totalorder %s65, %s79
      %p81 = scmp.eq.s32.totalorder %s20, 0
      %p82 = por %p80, %p81
      %s84 = sadd.s32 %s83, 1
      %p87 = scmp.eq.s32.totalorder %s14, 1
      %p88 = scmp.ne.s32.totalorder %s83, %s85
      %p89 = scmp.eq.s32.totalorder %s14, 0
      %p90 = por %p88, %p89
      %p91 = scmp.ne.s32.totalorder %s83, %s85
      %p92 = scmp.eq.s32.totalorder %s19, 1
      %p93 = por %p91, %p92
      %p94 = scmp.ne.s32.totalorder %s85, %s86
      %p95 = scmp.eq.s32.totalorder %s19, 0
      %p96 = por %p94, %p95
      %p97 = scmp.ne.s32.totalorder %s85, %s86
      %p98 = scmp.eq.s32.totalorder %s20, 1
      %p99 = por %p97, %p98
      %p101 = scmp.ne.s32.totalorder %s86, %s100
      %p102 = scmp.eq.s32.totalorder %s20, 0
      %p103 = por %p101, %p102
      %s105 = sadd.s32 %s104, 1
      %p108 = scmp.eq.s32.totalorder %s14, 1
      %p109 = scmp.ne.s32.totalorder %s104, %s106
      %p110 = scmp.eq.s32.totalorder %s14, 0
      %p111 = por %p109, %p110
      %p112 = scmp.ne.s32.totalorder %s104, %s106
      %p113 = scmp.eq.s32.totalorder %s19, 1
      %p114 = por %p112, %p113
      %p115 = scmp.ne.s32.totalorder %s106, %s107
      %p116 = scmp.eq.s32.totalorder %s19, 0
      %p117 = por %p115, %p116
      %p118 = scmp.ne.s32.totalorder %s106, %s107
      %p119 = scmp.eq.s32.totalorder %s20, 1
      %p120 = por %p118, %p119
      %p122 = scmp.ne.s32.totalorder %s107, %s121
      %p123 = scmp.eq.s32.totalorder %s20, 0
      %p124 = por %p122, %p123
      %s126 = sadd.s32 %s125, 1
      %p129 = scmp.eq.s32.totalorder %s14, 1
      %p130 = scmp.ne.s32.totalorder %s125, %s127
      %p131 = scmp.eq.s32.totalorder %s14, 0
      %p132 = por %p130, %p131
      %p133 = scmp.ne.s32.totalorder %s125, %s127
      %p134 = scmp.eq.s32.totalorder %s19, 1
      %p135 = por %p133, %p134
      %p136 = scmp.ne.s32.totalorder %s127, %s128
      %p137 = scmp.eq.s32.totalorder %s19, 0
      %p138 = por %p136, %p137
      %p139 = scmp.ne.s32.totalorder %s127, %s128
      %p140 = scmp.eq.s32.totalorder %s20, 1
      %p141 = por %p139, %p140
      %p143 = scmp.ne.s32.totalorder %s128, %s142
      %p144 = scmp.eq.s32.totalorder %s20, 0
      %p145 = por %p143, %p144
      %s146 = ssub.s32 %s21, %s33
      %s147 = ssub.s32 %s22, %s29
      %s148 = sor.u32 %s146, %s147
      %p149 = scmp.eq.s32.totalorder %s148, 0
      %s151 = sadd.s32 %s150, 1
      %s152 = scalar_select %p149, %s150, %s151
      %p155 = pneg %p149
      %p156 = scmp.eq.s32.totalorder %s14, 1
      %p157 = por %p155, %p156
      %p158 = scmp.ne.s32.totalorder %s150, %s153
      %p159 = scmp.eq.s32.totalorder %s14, 0
      %p160 = por %p158, %p159
      %p161 = scmp.ne.s32.totalorder %s150, %s153
      %p162 = scmp.eq.s32.totalorder %s19, 1
      %p163 = por %p161, %p162
      %p164 = scmp.ne.s32.totalorder %s153, %s154
      %p165 = scmp.eq.s32.totalorder %s19, 0
      %p166 = por %p164, %p165
      %p167 = scmp.ne.s32.totalorder %s153, %s154
      %p168 = scmp.eq.s32.totalorder %s20, 1
      %p169 = por %p167, %p168
      %p171 = scmp.ne.s32.totalorder %s154, %s170
      %p172 = scmp.eq.s32.totalorder %s20, 0
      %p173 = por %p171, %p172
      %p174 = scmp.le.s32.totalorder 1, %s14
      %p175 = scmp.lt.s32.totalorder %s14, 3
      %p176 = pnand %p174, %p175
      %p177 = pneg %p176
      // Predicated region
      $region9: #{tpu_custom_call.1} parent=5 // pred_check
        _
      $region10: #{tpu_custom_call.1} parent=5 // pred_check_branch
        %179 = sbr.rel (%p176) target = $region12
      $region11: #{tpu_custom_call.1} parent=5 // pred_region
        %s180 = ssub.s32 %s14, 1
        // Predicated region
        $region13: #{tpu_custom_call.1} parent=11 // pred_check
          %p181 = pneg %p75
        $region14: #{tpu_custom_call.1} parent=11 // pred_check_branch
          %183 = sbr.rel (%p181) target = $region16
        $region15: #{tpu_custom_call.1} parent=11 // pred_region
          _
        $region16: #{tpu_custom_call.1} parent=11 // pred_fallthru
          _
        // Predicated region
        $region17: #{tpu_custom_call.1} parent=11 // pred_check
          %p184 = pneg %p96
        $region18: #{tpu_custom_call.1} parent=11 // pred_check_branch
          %186 = sbr.rel (%p184) target = $region20
        $region19: #{tpu_custom_call.1} parent=11 // pred_region
          _
        $region20: #{tpu_custom_call.1} parent=11 // pred_fallthru
          _
        // Predicated region
        $region21: #{tpu_custom_call.1} parent=11 // pred_check
          %p187 = pneg %p117
        $region22: #{tpu_custom_call.1} parent=11 // pred_check_branch
          %189 = sbr.rel (%p187) target = $region24
        $region23: #{tpu_custom_call.1} parent=11 // pred_region
          _
        $region24: #{tpu_custom_call.1} parent=11 // pred_fallthru
          _
        // Predicated region
        $region25: #{tpu_custom_call.1} parent=11 // pred_check
          %p190 = pneg %p138
        $region26: #{tpu_custom_call.1} parent=11 // pred_check_branch
          %192 = sbr.rel (%p190) target = $region28
        $region27: #{tpu_custom_call.1} parent=11 // pred_region
          _
        $region28: #{tpu_custom_call.1} parent=11 // pred_fallthru
          _
      $region12: #{tpu_custom_call.1} parent=5 // pred_fallthru
        _
      %p193 = scmp.lt.s32.totalorder %s14, 2
      // Predicated region
      $region29: #{tpu_custom_call.1} parent=5 // pred_check
        %p194 = pneg %p193
      $region30: #{tpu_custom_call.1} parent=5 // pred_check_branch
        %196 = sbr.rel (%p194) target = $region32
      $region31: #{tpu_custom_call.1} parent=5 // pred_region
        // Predicated region
        $region33: #{tpu_custom_call.1} parent=31 // pred_check
          %p197 = pneg %p48
        $region34: #{tpu_custom_call.1} parent=31 // pred_check_branch
          %199 = sbr.rel (%p197) target = $region36
        $region35: #{tpu_custom_call.1} parent=31 // pred_region
          %s200 = sand.u32 %s38, 1
          %s201 = sand.u32 %s38, 1
          %s202 = smul.addr %s201, 16
          %s203 = scalar_lea.vmem [#allocation2], %s202
          %s204 = smul.u32 2, %s21
          %s205 = smul.u32 2, %s22
          %s206 = ssub.s32 3, %s205
          %p207 = scmp.lt.s32.totalorder %s206, 2
          %s208 = scalar_select %p207, %s206, 2
          %s209 = smul.u32 128, %s208
          %p210 = scmp.ne.s32.totalorder 0, %s209
          %s211 = smul.addr %s204, 3
          %s212 = sadd.s32 %s205, %s211
          %s213 = smul.addr %s212, 4
          %s214 = scalar_lea.vmem %s0, %s213
          %s215 = smul.u32 %s208, 4
          // Predicated region
          $region37: #{tpu_custom_call.1} parent=35 // pred_check
            %p216 = pneg %p210
          $region38: #{tpu_custom_call.1} parent=35 // pred_check_branch
            %218 = sbr.rel (%p216) target = $region40
          $region39: #{tpu_custom_call.1} parent=35 // pred_region
            %p219 = scmp.lt.u32.totalorder %s215, 8
            %p220 = pneg %p219
            // Predicated region
            $region41: #{tpu_custom_call.1} parent=39 // pred_check
              _
            $region42: #{tpu_custom_call.1} parent=39 // pred_check_branch
              %222 = sbr.rel (%p219) target = $region44
            $region43: #{tpu_custom_call.1} parent=39 // pred_region
              %s239 = sand.u32 %s215, 7
              %p240 = scmp.eq.s32.totalorder %s239, 0
              // Predicated region
              $region56: #{tpu_custom_call.1} parent=43 // pred_check
                %p241 = pneg %p240
              $region57: #{tpu_custom_call.1} parent=43 // pred_check_branch
                %243 = sbr.rel (%p241) target = $region59
              $region58: #{tpu_custom_call.1} parent=43 // pred_region
                %s244 = sshrl.u32 %s215, 3
                %s245 = sshrl.u32 %s244, 5
                // While loop
                $region60: #{tpu_custom_call.1} parent=58 // loop_pre_header
                  _
                $region61: #{tpu_custom_call.1} parent=58 // loop_header
                  %s249 = sphi 0, %s251
                  %p250 = scmp.ge.s32.totalorder %s249, %s245
                  %s254 = sphi 0, %s387
                  %s255 = sphi %s214, %s390
                  %s256 = sphi %s203, %s391
                $region62: #{tpu_custom_call.1} parent=58 // loop_header_branch
                  %253 = sbr.rel (%p250) target = $region66
                $region63: #{tpu_custom_call.1} parent=58 // loop_body
                  %v257 = vld [vmem:[%s255] sm:$0xff]
                  %258 = vst [vmem:[%s256] sm:$0xff] %v257
                  %v259 = vld [vmem:[%s255 + $0x8] sm:$0xff]
                  %260 = vst [vmem:[%s256 + $0x8] sm:$0xff] %v259
                  %v261 = vld [vmem:[%s255 + $0x10] sm:$0xff]
                  %262 = vst [vmem:[%s256 + $0x10] sm:$0xff] %v261
                  %v263 = vld [vmem:[%s255 + $0x18] sm:$0xff]
                  %264 = vst [vmem:[%s256 + $0x18] sm:$0xff] %v263
                  %v265 = vld [vmem:[%s255 + $0x20] sm:$0xff]
                  %266 = vst [vmem:[%s256 + $0x20] sm:$0xff] %v265
                  %v267 = vld [vmem:[%s255 + $0x28] sm:$0xff]
                  %268 = vst [vmem:[%s256 + $0x28] sm:$0xff] %v267
                  %v269 = vld [vmem:[%s255 + $0x30] sm:$0xff]
                  %270 = vst [vmem:[%s256 + $0x30] sm:$0xff] %v269
                  %v271 = vld [vmem:[%s255 + $0x38] sm:$0xff]
                  %272 = vst [vmem:[%s256 + $0x38] sm:$0xff] %v271
                  %v273 = vld [vmem:[%s255 + $0x40] sm:$0xff]
                  %274 = vst [vmem:[%s256 + $0x40] sm:$0xff] %v273
                  %v275 = vld [vmem:[%s255 + $0x48] sm:$0xff]
                  %276 = vst [vmem:[%s256 + $0x48] sm:$0xff] %v275
                  %v277 = vld [vmem:[%s255 + $0x50] sm:$0xff]
                  %278 = vst [vmem:[%s256 + $0x50] sm:$0xff] %v277
                  %v279 = vld [vmem:[%s255 + $0x58] sm:$0xff]
                  %280 = vst [vmem:[%s256 + $0x58] sm:$0xff] %v279
                  %v281 = vld [vmem:[%s255 + $0x60] sm:$0xff]
                  %282 = vst [vmem:[%s256 + $0x60] sm:$0xff] %v281
                  %v283 = vld [vmem:[%s255 + $0x68] sm:$0xff]
                  %284 = vst [vmem:[%s256 + $0x68] sm:$0xff] %v283
                  %v285 = vld [vmem:[%s255 + $0x70] sm:$0xff]
                  %286 = vst [vmem:[%s256 + $0x70] sm:$0xff] %v285
                  %v287 = vld [vmem:[%s255 + $0x78] sm:$0xff]
                  %288 = vst [vmem:[%s256 + $0x78] sm:$0xff] %v287
                  %v289 = vld [vmem:[%s255 + $0x80] sm:$0xff]
                  %290 = vst [vmem:[%s256 + $0x80] sm:$0xff] %v289
                  %v291 = vld [vmem:[%s255 + $0x88] sm:$0xff]
                  %292 = vst [vmem:[%s256 + $0x88] sm:$0xff] %v291
                  %v293 = vld [vmem:[%s255 + $0x90] sm:$0xff]
                  %294 = vst [vmem:[%s256 + $0x90] sm:$0xff] %v293
                  %v295 = vld [vmem:[%s255 + $0x98] sm:$0xff]
                  %296 = vst [vmem:[%s256 + $0x98] sm:$0xff] %v295
                  %v297 = vld [vmem:[%s255 + $0xa0] sm:$0xff]
                  %298 = vst [vmem:[%s256 + $0xa0] sm:$0xff] %v297
                  %v299 = vld [vmem:[%s255 + $0xa8] sm:$0xff]
                  %300 = vst [vmem:[%s256 + $0xa8] sm:$0xff] %v299
                  %v301 = vld [vmem:[%s255 + $0xb0] sm:$0xff]
                  %302 = vst [vmem:[%s256 + $0xb0] sm:$0xff] %v301
                  %v303 = vld [vmem:[%s255 + $0xb8] sm:$0xff]
                  %304 = vst [vmem:[%s256 + $0xb8] sm:$0xff] %v303
                  %v305 = vld [vmem:[%s255 + $0xc0] sm:$0xff]
                  %306 = vst [vmem:[%s256 + $0xc0] sm:$0xff] %v305
                  %v307 = vld [vmem:[%s255 + $0xc8] sm:$0xff]
                  %308 = vst [vmem:[%s256 + $0xc8] sm:$0xff] %v307
                  %v309 = vld [vmem:[%s255 + $0xd0] sm:$0xff]
                  %310 = vst [vmem:[%s256 + $0xd0] sm:$0xff] %v309
                  %v311 = vld [vmem:[%s255 + $0xd8] sm:$0xff]
                  %312 = vst [vmem:[%s256 + $0xd8] sm:$0xff] %v311
                  %v313 = vld [vmem:[%s255 + $0xe0] sm:$0xff]
                  %314 = vst [vmem:[%s256 + $0xe0] sm:$0xff] %v313
                  %v315 = vld [vmem:[%s255 + $0xe8] sm:$0xff]
                  %316 = vst [vmem:[%s256 + $0xe8] sm:$0xff] %v315
                  %v317 = vld [vmem:[%s255 + $0xf0] sm:$0xff]
                  %318 = vst [vmem:[%s256 + $0xf0] sm:$0xff] %v317
                  %v319 = vld [vmem:[%s255 + $0xf8] sm:$0xff]
                  %320 = vst [vmem:[%s256 + $0xf8] sm:$0xff] %v319
                  %v321 = vld [vmem:[%s255 + $0xc] sm:$0xff]
                  %322 = vst [vmem:[%s256 + $0x8] sm:$0xff] %v321
                  %v323 = vld [vmem:[%s255 + $0x14] sm:$0xff]
                  %324 = vst [vmem:[%s256 + $0x10] sm:$0xff] %v323
                  %v325 = vld [vmem:[%s255 + $0x1c] sm:$0xff]
                  %326 = vst [vmem:[%s256 + $0x18] sm:$0xff] %v325
                  %v327 = vld [vmem:[%s255 + $0x24] sm:$0xff]
                  %328 = vst [vmem:[%s256 + $0x20] sm:$0xff] %v327
                  %v329 = vld [vmem:[%s255 + $0x2c] sm:$0xff]
                  %330 = vst [vmem:[%s256 + $0x28] sm:$0xff] %v329
                  %v331 = vld [vmem:[%s255 + $0x34] sm:$0xff]
                  %332 = vst [vmem:[%s256 + $0x30] sm:$0xff] %v331
                  %v333 = vld [vmem:[%s255 + $0x3c] sm:$0xff]
                  %334 = vst [vmem:[%s256 + $0x38] sm:$0xff] %v333
                  %v335 = vld [vmem:[%s255 + $0x44] sm:$0xff]
                  %336 = vst [vmem:[%s256 + $0x40] sm:$0xff] %v335
                  %v337 = vld [vmem:[%s255 + $0x4c] sm:$0xff]
                  %338 = vst [vmem:[%s256 + $0x48] sm:$0xff] %v337
                  %v339 = vld [vmem:[%s255 + $0x54] sm:$0xff]
                  %340 = vst [vmem:[%s256 + $0x50] sm:$0xff] %v339
                  %v341 = vld [vmem:[%s255 + $0x5c] sm:$0xff]
                  %342 = vst [vmem:[%s256 + $0x58] sm:$0xff] %v341
                  %v343 = vld [vmem:[%s255 + $0x64] sm:$0xff]
                  %344 = vst [vmem:[%s256 + $0x60] sm:$0xff] %v343
                  %v345 = vld [vmem:[%s255 + $0x6c] sm:$0xff]
                  %346 = vst [vmem:[%s256 + $0x68] sm:$0xff] %v345
                  %v347 = vld [vmem:[%s255 + $0x74] sm:$0xff]
                  %348 = vst [vmem:[%s256 + $0x70] sm:$0xff] %v347
                  %v349 = vld [vmem:[%s255 + $0x7c] sm:$0xff]
                  %350 = vst [vmem:[%s256 + $0x78] sm:$0xff] %v349
                  %v351 = vld [vmem:[%s255 + $0x84] sm:$0xff]
                  %352 = vst [vmem:[%s256 + $0x80] sm:$0xff] %v351
                  %v353 = vld [vmem:[%s255 + $0x8c] sm:$0xff]
                  %354 = vst [vmem:[%s256 + $0x88] sm:$0xff] %v353
                  %v355 = vld [vmem:[%s255 + $0x94] sm:$0xff]
                  %356 = vst [vmem:[%s256 + $0x90] sm:$0xff] %v355
                  %v357 = vld [vmem:[%s255 + $0x9c] sm:$0xff]
                  %358 = vst [vmem:[%s256 + $0x98] sm:$0xff] %v357
                  %v359 = vld [vmem:[%s255 + $0xa4] sm:$0xff]
                  %360 = vst [vmem:[%s256 + $0xa0] sm:$0xff] %v359
                  %v361 = vld [vmem:[%s255 + $0xac] sm:$0xff]
                  %362 = vst [vmem:[%s256 + $0xa8] sm:$0xff] %v361
                  %v363 = vld [vmem:[%s255 + $0xb4] sm:$0xff]
                  %364 = vst [vmem:[%s256 + $0xb0] sm:$0xff] %v363
                  %v365 = vld [vmem:[%s255 + $0xbc] sm:$0xff]
                  %366 = vst [vmem:[%s256 + $0xb8] sm:$0xff] %v365
                  %v367 = vld [vmem:[%s255 + $0xc4] sm:$0xff]
                  %368 = vst [vmem:[%s256 + $0xc0] sm:$0xff] %v367
                  %v369 = vld [vmem:[%s255 + $0xcc] sm:$0xff]
                  %370 = vst [vmem:[%s256 + $0xc8] sm:$0xff] %v369
                  %v371 = vld [vmem:[%s255 + $0xd4] sm:$0xff]
                  %372 = vst [vmem:[%s256 + $0xd0] sm:$0xff] %v371
                  %v373 = vld [vmem:[%s255 + $0xdc] sm:$0xff]
                  %374 = vst [vmem:[%s256 + $0xd8] sm:$0xff] %v373
                  %v375 = vld [vmem:[%s255 + $0xe4] sm:$0xff]
                  %376 = vst [vmem:[%s256 + $0xe0] sm:$0xff] %v375
                  %v377 = vld [vmem:[%s255 + $0xec] sm:$0xff]
                  %378 = vst [vmem:[%s256 + $0xe8] sm:$0xff] %v377
                  %v379 = vld [vmem:[%s255 + $0xf4] sm:$0xff]
                  %380 = vst [vmem:[%s256 + $0xf0] sm:$0xff] %v379
                  %v381 = vld [vmem:[%s255 + $0xfc] sm:$0xff]
                  %382 = vst [vmem:[%s256 + $0xf8] sm:$0xff] %v381
                  %v383 = vld [vmem:[%s255 + $0x104] sm:$0xff]
                  %384 = vst [vmem:[%s256 + $0x100] sm:$0xff] %v383
                  %s385 = sadd.s32 1, %s254
                  %p386 = scmp.ge.s32.totalorder %s385, %s245
                  %s387 = scalar_select %p386, 0, %s385
                  %s388 = smul.u32 %s387, 256
                  %s389 = smul.u32 %s387, 256
                  %s390 = scalar_lea.vmem %s214, %s388
                  %s391 = scalar_lea.vmem %s203, %s389 [#allocation2]
                $region64: #{tpu_custom_call.1} parent=58 // loop_footer
                  %s251 = sadd.s32 %s249, 1
                $region65: #{tpu_custom_call.1} parent=58 // loop_footer_branch
                  %248 = sbr.rel target = $region61
                $region66: #{tpu_custom_call.1} parent=58 // loop_exit
                  _
                %s392 = sshrl.u32 %s244, 5
                %s393 = sand.u32 %s244, 31
                %s394 = smul.u32 %s392, 32
                %s395 = smul.u32 128, %s394
                %s396 = sshra.s32 %s395, 4
                %s397 = scalar_lea.vmem %s214, %s396
                %s398 = smul.u32 128, %s394
                %s399 = sshra.s32 %s398, 4
                %s400 = scalar_lea.vmem %s203, %s399 [#allocation2]
                // While loop
                $region67: #{tpu_custom_call.1} parent=58 // loop_pre_header
                  _
                $region68: #{tpu_custom_call.1} parent=58 // loop_header
                  %s404 = sphi 0, %s406
                  %p405 = scmp.ge.s32.totalorder %s404, %s393
                  %s409 = sphi 0, %s418
                  %s410 = sphi %s397, %s421
                  %s411 = sphi %s400, %s422
                $region69: #{tpu_custom_call.1} parent=58 // loop_header_branch
                  %408 = sbr.rel (%p405) target = $region73
                $region70: #{tpu_custom_call.1} parent=58 // loop_body
                  %v412 = vld [vmem:[%s410] sm:$0xff]
                  %413 = vst [vmem:[%s411] sm:$0xff] %v412
                  %v414 = vld [vmem:[%s410 + $0xc] sm:$0xff]
                  %415 = vst [vmem:[%s411 + $0x8] sm:$0xff] %v414
                  %s416 = sadd.s32 1, %s409
                  %p417 = scmp.ge.s32.totalorder %s416, %s393
                  %s418 = scalar_select %p417, 0, %s416
                  %s419 = smul.u32 %s418, 8
                  %s420 = smul.u32 %s418, 8
                  %s421 = scalar_lea.vmem %s397, %s419
                  %s422 = scalar_lea.vmem %s400, %s420 [#allocation2]
                $region71: #{tpu_custom_call.1} parent=58 // loop_footer
                  %s406 = sadd.s32 %s404, 1
                $region72: #{tpu_custom_call.1} parent=58 // loop_footer_branch
                  %403 = sbr.rel target = $region68
                $region73: #{tpu_custom_call.1} parent=58 // loop_exit
                  _
              $region59: #{tpu_custom_call.1} parent=43 // pred_fallthru
                _
              %p423 = pneg %p240
              // Predicated region
              $region74: #{tpu_custom_call.1} parent=43 // pred_check
                _
              $region75: #{tpu_custom_call.1} parent=43 // pred_check_branch
                %425 = sbr.rel (%p240) target = $region77
              $region76: #{tpu_custom_call.1} parent=43 // pred_region
                %s426 = sand.u32 %s215, 7
                %s427 = ssub.s32 %s215, %s426
                %s428 = scalar_lea.vmem %s214, %s427
                %s429 = ssub.s32 %s215, %s426
                %s430 = scalar_lea.vmem %s203, %s429 [#allocation2]
                %s431 = sshrl.u32 %s215, 3
                %s432 = sshrl.u32 %s431, 5
                // While loop
                $region78: #{tpu_custom_call.1} parent=76 // loop_pre_header
                  _
                $region79: #{tpu_custom_call.1} parent=76 // loop_header
                  %s436 = sphi 0, %s438
                  %p437 = scmp.ge.s32.totalorder %s436, %s432
                  %s441 = sphi 0, %s574
                  %s442 = sphi %s214, %s577
                  %s443 = sphi %s203, %s578
                $region80: #{tpu_custom_call.1} parent=76 // loop_header_branch
                  %440 = sbr.rel (%p437) target = $region84
                $region81: #{tpu_custom_call.1} parent=76 // loop_body
                  %v444 = vld [vmem:[%s442] sm:$0xff]
                  %445 = vst [vmem:[%s443] sm:$0xff] %v444
                  %v446 = vld [vmem:[%s442 + $0x8] sm:$0xff]
                  %447 = vst [vmem:[%s443 + $0x8] sm:$0xff] %v446
                  %v448 = vld [vmem:[%s442 + $0x10] sm:$0xff]
                  %449 = vst [vmem:[%s443 + $0x10] sm:$0xff] %v448
                  %v450 = vld [vmem:[%s442 + $0x18] sm:$0xff]
                  %451 = vst [vmem:[%s443 + $0x18] sm:$0xff] %v450
                  %v452 = vld [vmem:[%s442 + $0x20] sm:$0xff]
                  %453 = vst [vmem:[%s443 + $0x20] sm:$0xff] %v452
                  %v454 = vld [vmem:[%s442 + $0x28] sm:$0xff]
                  %455 = vst [vmem:[%s443 + $0x28] sm:$0xff] %v454
                  %v456 = vld [vmem:[%s442 + $0x30] sm:$0xff]
                  %457 = vst [vmem:[%s443 + $0x30] sm:$0xff] %v456
                  %v458 = vld [vmem:[%s442 + $0x38] sm:$0xff]
                  %459 = vst [vmem:[%s443 + $0x38] sm:$0xff] %v458
                  %v460 = vld [vmem:[%s442 + $0x40] sm:$0xff]
                  %461 = vst [vmem:[%s443 + $0x40] sm:$0xff] %v460
                  %v462 = vld [vmem:[%s442 + $0x48] sm:$0xff]
                  %463 = vst [vmem:[%s443 + $0x48] sm:$0xff] %v462
                  %v464 = vld [vmem:[%s442 + $0x50] sm:$0xff]
                  %465 = vst [vmem:[%s443 + $0x50] sm:$0xff] %v464
                  %v466 = vld [vmem:[%s442 + $0x58] sm:$0xff]
                  %467 = vst [vmem:[%s443 + $0x58] sm:$0xff] %v466
                  %v468 = vld [vmem:[%s442 + $0x60] sm:$0xff]
                  %469 = vst [vmem:[%s443 + $0x60] sm:$0xff] %v468
                  %v470 = vld [vmem:[%s442 + $0x68] sm:$0xff]
                  %471 = vst [vmem:[%s443 + $0x68] sm:$0xff] %v470
                  %v472 = vld [vmem:[%s442 + $0x70] sm:$0xff]
                  %473 = vst [vmem:[%s443 + $0x70] sm:$0xff] %v472
                  %v474 = vld [vmem:[%s442 + $0x78] sm:$0xff]
                  %475 = vst [vmem:[%s443 + $0x78] sm:$0xff] %v474
                  %v476 = vld [vmem:[%s442 + $0x80] sm:$0xff]
                  %477 = vst [vmem:[%s443 + $0x80] sm:$0xff] %v476
                  %v478 = vld [vmem:[%s442 + $0x88] sm:$0xff]
                  %479 = vst [vmem:[%s443 + $0x88] sm:$0xff] %v478
                  %v480 = vld [vmem:[%s442 + $0x90] sm:$0xff]
                  %481 = vst [vmem:[%s443 + $0x90] sm:$0xff] %v480
                  %v482 = vld [vmem:[%s442 + $0x98] sm:$0xff]
                  %483 = vst [vmem:[%s443 + $0x98] sm:$0xff] %v482
                  %v484 = vld [vmem:[%s442 + $0xa0] sm:$0xff]
                  %485 = vst [vmem:[%s443 + $0xa0] sm:$0xff] %v484
                  %v486 = vld [vmem:[%s442 + $0xa8] sm:$0xff]
                  %487 = vst [vmem:[%s443 + $0xa8] sm:$0xff] %v486
                  %v488 = vld [vmem:[%s442 + $0xb0] sm:$0xff]
                  %489 = vst [vmem:[%s443 + $0xb0] sm:$0xff] %v488
                  %v490 = vld [vmem:[%s442 + $0xb8] sm:$0xff]
                  %491 = vst [vmem:[%s443 + $0xb8] sm:$0xff] %v490
                  %v492 = vld [vmem:[%s442 + $0xc0] sm:$0xff]
                  %493 = vst [vmem:[%s443 + $0xc0] sm:$0xff] %v492
                  %v494 = vld [vmem:[%s442 + $0xc8] sm:$0xff]
                  %495 = vst [vmem:[%s443 + $0xc8] sm:$0xff] %v494
                  %v496 = vld [vmem:[%s442 + $0xd0] sm:$0xff]
                  %497 = vst [vmem:[%s443 + $0xd0] sm:$0xff] %v496
                  %v498 = vld [vmem:[%s442 + $0xd8] sm:$0xff]
                  %499 = vst [vmem:[%s443 + $0xd8] sm:$0xff] %v498
                  %v500 = vld [vmem:[%s442 + $0xe0] sm:$0xff]
                  %501 = vst [vmem:[%s443 + $0xe0] sm:$0xff] %v500
                  %v502 = vld [vmem:[%s442 + $0xe8] sm:$0xff]
                  %503 = vst [vmem:[%s443 + $0xe8] sm:$0xff] %v502
                  %v504 = vld [vmem:[%s442 + $0xf0] sm:$0xff]
                  %505 = vst [vmem:[%s443 + $0xf0] sm:$0xff] %v504
                  %v506 = vld [vmem:[%s442 + $0xf8] sm:$0xff]
                  %507 = vst [vmem:[%s443 + $0xf8] sm:$0xff] %v506
                  %v508 = vld [vmem:[%s442 + $0xc] sm:$0xff]
                  %509 = vst [vmem:[%s443 + $0x8] sm:$0xff] %v508
                  %v510 = vld [vmem:[%s442 + $0x14] sm:$0xff]
                  %511 = vst [vmem:[%s443 + $0x10] sm:$0xff] %v510
                  %v512 = vld [vmem:[%s442 + $0x1c] sm:$0xff]
                  %513 = vst [vmem:[%s443 + $0x18] sm:$0xff] %v512
                  %v514 = vld [vmem:[%s442 + $0x24] sm:$0xff]
                  %515 = vst [vmem:[%s443 + $0x20] sm:$0xff] %v514
                  %v516 = vld [vmem:[%s442 + $0x2c] sm:$0xff]
                  %517 = vst [vmem:[%s443 + $0x28] sm:$0xff] %v516
                  %v518 = vld [vmem:[%s442 + $0x34] sm:$0xff]
                  %519 = vst [vmem:[%s443 + $0x30] sm:$0xff] %v518
                  %v520 = vld [vmem:[%s442 + $0x3c] sm:$0xff]
                  %521 = vst [vmem:[%s443 + $0x38] sm:$0xff] %v520
                  %v522 = vld [vmem:[%s442 + $0x44] sm:$0xff]
                  %523 = vst [vmem:[%s443 + $0x40] sm:$0xff] %v522
                  %v524 = vld [vmem:[%s442 + $0x4c] sm:$0xff]
                  %525 = vst [vmem:[%s443 + $0x48] sm:$0xff] %v524
                  %v526 = vld [vmem:[%s442 + $0x54] sm:$0xff]
                  %527 = vst [vmem:[%s443 + $0x50] sm:$0xff] %v526
                  %v528 = vld [vmem:[%s442 + $0x5c] sm:$0xff]
                  %529 = vst [vmem:[%s443 + $0x58] sm:$0xff] %v528
                  %v530 = vld [vmem:[%s442 + $0x64] sm:$0xff]
                  %531 = vst [vmem:[%s443 + $0x60] sm:$0xff] %v530
                  %v532 = vld [vmem:[%s442 + $0x6c] sm:$0xff]
                  %533 = vst [vmem:[%s443 + $0x68] sm:$0xff] %v532
                  %v534 = vld [vmem:[%s442 + $0x74] sm:$0xff]
                  %535 = vst [vmem:[%s443 + $0x70] sm:$0xff] %v534
                  %v536 = vld [vmem:[%s442 + $0x7c] sm:$0xff]
                  %537 = vst [vmem:[%s443 + $0x78] sm:$0xff] %v536
                  %v538 = vld [vmem:[%s442 + $0x84] sm:$0xff]
                  %539 = vst [vmem:[%s443 + $0x80] sm:$0xff] %v538
                  %v540 = vld [vmem:[%s442 + $0x8c] sm:$0xff]
                  %541 = vst [vmem:[%s443 + $0x88] sm:$0xff] %v540
                  %v542 = vld [vmem:[%s442 + $0x94] sm:$0xff]
                  %543 = vst [vmem:[%s443 + $0x90] sm:$0xff] %v542
                  %v544 = vld [vmem:[%s442 + $0x9c] sm:$0xff]
                  %545 = vst [vmem:[%s443 + $0x98] sm:$0xff] %v544
                  %v546 = vld [vmem:[%s442 + $0xa4] sm:$0xff]
                  %547 = vst [vmem:[%s443 + $0xa0] sm:$0xff] %v546
                  %v548 = vld [vmem:[%s442 + $0xac] sm:$0xff]
                  %549 = vst [vmem:[%s443 + $0xa8] sm:$0xff] %v548
                  %v550 = vld [vmem:[%s442 + $0xb4] sm:$0xff]
                  %551 = vst [vmem:[%s443 + $0xb0] sm:$0xff] %v550
                  %v552 = vld [vmem:[%s442 + $0xbc] sm:$0xff]
                  %553 = vst [vmem:[%s443 + $0xb8] sm:$0xff] %v552
                  %v554 = vld [vmem:[%s442 + $0xc4] sm:$0xff]
                  %555 = vst [vmem:[%s443 + $0xc0] sm:$0xff] %v554
                  %v556 = vld [vmem:[%s442 + $0xcc] sm:$0xff]
                  %557 = vst [vmem:[%s443 + $0xc8] sm:$0xff] %v556
                  %v558 = vld [vmem:[%s442 + $0xd4] sm:$0xff]
                  %559 = vst [vmem:[%s443 + $0xd0] sm:$0xff] %v558
                  %v560 = vld [vmem:[%s442 + $0xdc] sm:$0xff]
                  %561 = vst [vmem:[%s443 + $0xd8] sm:$0xff] %v560
                  %v562 = vld [vmem:[%s442 + $0xe4] sm:$0xff]
                  %563 = vst [vmem:[%s443 + $0xe0] sm:$0xff] %v562
                  %v564 = vld [vmem:[%s442 + $0xec] sm:$0xff]
                  %565 = vst [vmem:[%s443 + $0xe8] sm:$0xff] %v564
                  %v566 = vld [vmem:[%s442 + $0xf4] sm:$0xff]
                  %567 = vst [vmem:[%s443 + $0xf0] sm:$0xff] %v566
                  %v568 = vld [vmem:[%s442 + $0xfc] sm:$0xff]
                  %569 = vst [vmem:[%s443 + $0xf8] sm:$0xff] %v568
                  %v570 = vld [vmem:[%s442 + $0x104] sm:$0xff]
                  %571 = vst [vmem:[%s443 + $0x100] sm:$0xff] %v570
                  %s572 = sadd.s32 1, %s441
                  %p573 = scmp.ge.s32.totalorder %s572, %s432
                  %s574 = scalar_select %p573, 0, %s572
                  %s575 = smul.u32 %s574, 256
                  %s576 = smul.u32 %s574, 256
                  %s577 = scalar_lea.vmem %s214, %s575
                  %s578 = scalar_lea.vmem %s203, %s576 [#allocation2]
                $region82: #{tpu_custom_call.1} parent=76 // loop_footer
                  %s438 = sadd.s32 %s436, 1
                $region83: #{tpu_custom_call.1} parent=76 // loop_footer_branch
                  %435 = sbr.rel target = $region79
                $region84: #{tpu_custom_call.1} parent=76 // loop_exit
                  _
                %s579 = sshrl.u32 %s431, 5
                %s580 = sand.u32 %s431, 31
                %s581 = smul.u32 %s579, 32
                %s582 = smul.u32 128, %s581
                %s583 = sshra.s32 %s582, 4
                %s584 = scalar_lea.vmem %s214, %s583
                %s585 = smul.u32 128, %s581
                %s586 = sshra.s32 %s585, 4
                %s587 = scalar_lea.vmem %s203, %s586 [#allocation2]
                // While loop
                $region85: #{tpu_custom_call.1} parent=76 // loop_pre_header
                  _
                $region86: #{tpu_custom_call.1} parent=76 // loop_header
                  %s591 = sphi 0, %s593
                  %p592 = scmp.ge.s32.totalorder %s591, %s580
                  %s596 = sphi 0, %s605
                  %s597 = sphi %s584, %s608
                  %s598 = sphi %s587, %s609
                $region87: #{tpu_custom_call.1} parent=76 // loop_header_branch
                  %595 = sbr.rel (%p592) target = $region91
                $region88: #{tpu_custom_call.1} parent=76 // loop_body
                  %v599 = vld [vmem:[%s597] sm:$0xff]
                  %600 = vst [vmem:[%s598] sm:$0xff] %v599
                  %v601 = vld [vmem:[%s597 + $0xc] sm:$0xff]
                  %602 = vst [vmem:[%s598 + $0x8] sm:$0xff] %v601
                  %s603 = sadd.s32 1, %s596
                  %p604 = scmp.ge.s32.totalorder %s603, %s580
                  %s605 = scalar_select %p604, 0, %s603
                  %s606 = smul.u32 %s605, 8
                  %s607 = smul.u32 %s605, 8
                  %s608 = scalar_lea.vmem %s584, %s606
                  %s609 = scalar_lea.vmem %s587, %s607 [#allocation2]
                $region89: #{tpu_custom_call.1} parent=76 // loop_footer
                  %s593 = sadd.s32 %s591, 1
                $region90: #{tpu_custom_call.1} parent=76 // loop_footer_branch
                  %590 = sbr.rel target = $region86
                $region91: #{tpu_custom_call.1} parent=76 // loop_exit
                  _
                %s610 = sshllo.u32 0, %s426
                loop: start=0, step=1, limit=1
                $region92: #{tpu_custom_call.1} parent=76 // loop_pre_header
                  _
                $region93: #{tpu_custom_call.1} parent=76 // loop_header
                  %s612 = sphi 0, %s616
                  %p613 = scmp.ge.s32.totalorder %s612, 1
                  %s617 = sphi %s428, %s428
                  %s618 = sphi %s430, %s430
                $region94: #{tpu_custom_call.1} parent=76 // loop_header_branch
                  %615 = sbr.rel (%p613) target = $region98
                $region95: #{tpu_custom_call.1} parent=76 // loop_body
                  %v619 = vld [vmem:[%s617] sm:%s610]
                  %620 = vst [vmem:[%s618] sm:%s610] %v619
                  %v621 = vld [vmem:[%s617 + $0xc] sm:%s610]
                  %622 = vst [vmem:[%s618 + $0x8] sm:%s610] %v621
                $region96: #{tpu_custom_call.1} parent=76 // loop_footer
                  %s616 = sadd.s32 1, %s612
                $region97: #{tpu_custom_call.1} parent=76 // loop_footer_branch
                  %611 = sbr.rel target = $region93
                $region98: #{tpu_custom_call.1} parent=76 // loop_exit
                  _
              $region77: #{tpu_custom_call.1} parent=43 // pred_fallthru
                _
            $region44: #{tpu_custom_call.1} parent=39 // pred_fallthru
              _
            // Predicated region
            $region45: #{tpu_custom_call.1} parent=39 // pred_check
              %p223 = pneg %p219
            $region46: #{tpu_custom_call.1} parent=39 // pred_check_branch
              %225 = sbr.rel (%p223) target = $region48
            $region47: #{tpu_custom_call.1} parent=39 // pred_region
              %s226 = sshllo.u32 0, %s215
              loop: start=0, step=1, limit=1
              $region49: #{tpu_custom_call.1} parent=47 // loop_pre_header
                _
              $region50: #{tpu_custom_call.1} parent=47 // loop_header
                %s228 = sphi 0, %s232
                %p229 = scmp.ge.s32.totalorder %s228, 1
                %s233 = sphi %s214, %s214
                %s234 = sphi %s203, %s203
              $region51: #{tpu_custom_call.1} parent=47 // loop_header_branch
                %231 = sbr.rel (%p229) target = $region55
              $region52: #{tpu_custom_call.1} parent=47 // loop_body
                %v235 = vld [vmem:[%s233] sm:%s226]
                %236 = vst [vmem:[%s234] sm:%s226] %v235
                %v237 = vld [vmem:[%s233 + $0xc] sm:%s226]
                %238 = vst [vmem:[%s234 + $0x8] sm:%s226] %v237
              $region53: #{tpu_custom_call.1} parent=47 // loop_footer
                %s232 = sadd.s32 1, %s228
              $region54: #{tpu_custom_call.1} parent=47 // loop_footer_branch
                %227 = sbr.rel target = $region50
              $region55: #{tpu_custom_call.1} parent=47 // loop_exit
                _
            $region48: #{tpu_custom_call.1} parent=39 // pred_fallthru
              _
          $region40: #{tpu_custom_call.1} parent=35 // pred_fallthru
            _
          %623 = vnop
        $region36: #{tpu_custom_call.1} parent=31 // pred_fallthru
          _
      $region32: #{tpu_custom_call.1} parent=5 // pred_fallthru
        _
      %p624 = scmp.le.s32.totalorder 1, %s14
      %p625 = scmp.lt.s32.totalorder %s14, 3
      %p626 = pnand %p624, %p625
      %p627 = pneg %p626
      // Predicated region
      $region99: #{tpu_custom_call.1} parent=5 // pred_check
        _
      $region100: #{tpu_custom_call.1} parent=5 // pred_check_branch
        %629 = sbr.rel (%p626) target = $region102
      $region101: #{tpu_custom_call.1} parent=5 // pred_region
        %s630 = ssub.s32 %s14, 1
        %s631 = sand.u32 %s41, 1
        %s632 = sand.u32 %s41, 1
        %s633 = smul.addr %s632, 16
        %s634 = scalar_lea.vmem [#allocation2], %s633
        // Predicated region
        $region103: #{tpu_custom_call.1} parent=101 // pred_check
          %p635 = pneg %p54
        $region104: #{tpu_custom_call.1} parent=101 // pred_check_branch
          %637 = sbr.rel (%p635) target = $region106
        $region105: #{tpu_custom_call.1} parent=101 // pred_region
          _
        $region106: #{tpu_custom_call.1} parent=101 // pred_fallthru
          _
        %s638 = sand.u32 %s41, 1
        %s639 = sand.u32 %s41, 1
        %s640 = smul.addr %s639, 16
        %s641 = scalar_lea.vmem [#allocation2], %s640
        %p642 = pneg %p54
        %p643 = pneg %p51
        %p644 = pneg %p75
        %p645 = pneg %p72
        %p646 = pneg %p96
        %p647 = pneg %p93
        %p648 = pneg %p117
        %p649 = pneg %p114
        %p650 = pneg %p138
        %p651 = pneg %p135
        %p652 = pneg %p166
        %p653 = pneg %p163
        %s654 = sand.u32 %s153, 1
        %s655 = scalar_lea.sflag [#allocation4], %s654
        %s656 = sand.u32 %s153, 1
        %s657 = smul.addr %s656, 256
        %s658 = scalar_lea.vmem [#allocation3], %s657
        %s659 = smul.u32 2, %s23
        %s660 = smul.u32 2, %s24
        %s661 = ssub.s32 3, %s660
        %p662 = scmp.lt.s32.totalorder %s661, 2
        %s663 = scalar_select %p662, %s661, 2
        %s664 = smul.u32 128, %s663
        %s665 = smul.u32 2, %s23
        %s666 = smul.u32 2, %s24
        %s667 = ssub.s32 3, %s666
        %p668 = scmp.lt.s32.totalorder %s667, 2
        %s669 = scalar_select %p668, %s667, 2
        %s670 = smul.u32 2048, %s669
        %v672 = vld [vmem:[%s1] sm:$0xff]
        %v673 = vld [vmem:[%s1 + $0x8] sm:$0xff]
        %v674 = vld [vmem:[%s1 + $0x10] sm:$0xff]
        %v675 = vld [vmem:[%s1 + $0x18] sm:$0xff]
        %v676 = vld [vmem:[%s1 + $0x20] sm:$0xff]
        %v677 = vld [vmem:[%s1 + $0x28] sm:$0xff]
        %v678 = vld [vmem:[%s1 + $0x30] sm:$0xff]
        %v679 = vld [vmem:[%s1 + $0x38] sm:$0xff]
        %v680 = vld [vmem:[%s2] sm:$0xff]
        %v681 = vld [vmem:[%s2 + $0x8] sm:$0xff]
        %v682 = vld [vmem:[%s2 + $0x10] sm:$0xff]
        %v683 = vld [vmem:[%s2 + $0x18] sm:$0xff]
        %v684 = vld [vmem:[%s2 + $0x20] sm:$0xff]
        %v685 = vld [vmem:[%s2 + $0x28] sm:$0xff]
        %v686 = vld [vmem:[%s2 + $0x30] sm:$0xff]
        %v687 = vld [vmem:[%s2 + $0x38] sm:$0xff]
        %v688 = vld [vmem:[%s3] sm:$0xf]
        %v689 = vld [vmem:[%s3 + $0x4] sm:$0xf]
        %v690 = vld [vmem:[%s3 + $0x8] sm:$0xf]
        %v691 = vld [vmem:[%s3 + $0xc] sm:$0xf]
        %v692 = vld [vmem:[%s3 + $0x10] sm:$0xf]
        %v693 = vld [vmem:[%s3 + $0x14] sm:$0xf]
        %v694 = vld [vmem:[%s3 + $0x18] sm:$0xf]
        %v695 = vld [vmem:[%s3 + $0x1c] sm:$0xf]
        %v696 = vld [vmem:[%s4] sm:$0xff]
        %v697 = vld [vmem:[%s4 + $0x8] sm:$0xff]
        %v698 = vld [vmem:[%s4 + $0x10] sm:$0xff]
        %v699 = vld [vmem:[%s4 + $0x18] sm:$0xff]
        %v700 = vld [vmem:[%s4 + $0x20] sm:$0xff]
        %v701 = vld [vmem:[%s4 + $0x28] sm:$0xff]
        %v702 = vld [vmem:[%s4 + $0x30] sm:$0xff]
        %v703 = vld [vmem:[%s4 + $0x38] sm:$0xff]
        %v704 = vld [vmem:[%s634] sm:$0x77]
        %706 = vset.pattern.permute.xlu0 0
        %707 = vperm.xlu0 %706, %v672
        %v708 = vpop.permute.xlu0 %707
        %711 = vset.pattern.permute.xlu0 0
        %712 = vperm.xlu0 %711, %v673
        %v713 = vpop.permute.xlu0 %712
        %716 = vset.pattern.permute.xlu0 0
        %717 = vperm.xlu0 %716, %v674
        %v718 = vpop.permute.xlu0 %717
        %721 = vset.pattern.permute.xlu0 0
        %722 = vperm.xlu0 %721, %v675
        %v723 = vpop.permute.xlu0 %722
        %726 = vset.pattern.permute.xlu0 0
        %727 = vperm.xlu0 %726, %v676
        %v728 = vpop.permute.xlu0 %727
        %731 = vset.pattern.permute.xlu0 0
        %732 = vperm.xlu0 %731, %v677
        %v733 = vpop.permute.xlu0 %732
        %736 = vset.pattern.permute.xlu0 0
        %737 = vperm.xlu0 %736, %v678
        %v738 = vpop.permute.xlu0 %737
        %741 = vset.pattern.permute.xlu0 0
        %742 = vperm.xlu0 %741, %v679
        %v743 = vpop.permute.xlu0 %742
        %v746 = vlaneseq
        %v747 = vshrl.u32 %v746, 7
        %v748 = vsub.s32 0, %v747
        %v749 = vrot.slane %v704, %v748
        %v750 = vlaneseq
        %v751 = vshrl.u32 %v750, 7
        %v752 = vsub.s32 4, %v751
        %v753 = vrot.slane %v704, %v752
        %v756 = vlaneseq
        %v757 = vshrl.u32 %v756, 7
        %v758 = vsub.s32 0, %v757
        %v759 = vrot.slane %v749, %v758
        %v760 = vlaneseq
        %v761 = vshrl.u32 %v760, 7
        %v762 = vsub.s32 0, %v761
        %v763 = vrot.slane %v753, %v762
        %v764 = vmul.f32 %v708, %v759
        %v765 = vmul.f32 %v708, %v763
        %v766 = vmul.f32 %v713, %v759
        %v767 = vmul.f32 %v713, %v763
        %v768 = vmul.f32 %v718, %v759
        %v769 = vmul.f32 %v718, %v763
        %v770 = vmul.f32 %v723, %v759
        %v771 = vmul.f32 %v723, %v763
        %v772 = vmul.f32 %v728, %v759
        %v773 = vmul.f32 %v728, %v763
        %v774 = vmul.f32 %v733, %v759
        %v775 = vmul.f32 %v733, %v763
        %v776 = vmul.f32 %v738, %v759
        %v777 = vmul.f32 %v738, %v763
        %v778 = vmul.f32 %v743, %v759
        %v779 = vmul.f32 %v743, %v763
        %781 = vset.pattern.permute.xlu0 0
        %782 = vperm.xlu0 %781, %v680
        %v783 = vpop.permute.xlu0 %782
        %786 = vset.pattern.permute.xlu0 0
        %787 = vperm.xlu0 %786, %v681
        %v788 = vpop.permute.xlu0 %787
        %791 = vset.pattern.permute.xlu0 0
        %792 = vperm.xlu0 %791, %v682
        %v793 = vpop.permute.xlu0 %792
        %796 = vset.pattern.permute.xlu0 0
        %797 = vperm.xlu0 %796, %v683
        %v798 = vpop.permute.xlu0 %797
        %801 = vset.pattern.permute.xlu0 0
        %802 = vperm.xlu0 %801, %v684
        %v803 = vpop.permute.xlu0 %802
        %806 = vset.pattern.permute.xlu0 0
        %807 = vperm.xlu0 %806, %v685
        %v808 = vpop.permute.xlu0 %807
        %811 = vset.pattern.permute.xlu0 0
        %812 = vperm.xlu0 %811, %v686
        %v813 = vpop.permute.xlu0 %812
        %816 = vset.pattern.permute.xlu0 0
        %817 = vperm.xlu0 %816, %v687
        %v818 = vpop.permute.xlu0 %817
        %v820 = vadd.f32 %v783, %v764
        %v821 = vadd.f32 %v783, %v765
        %v822 = vadd.f32 %v788, %v766
        %v823 = vadd.f32 %v788, %v767
        %v824 = vadd.f32 %v793, %v768
        %v825 = vadd.f32 %v793, %v769
        %v826 = vadd.f32 %v798, %v770
        %v827 = vadd.f32 %v798, %v771
        %v828 = vadd.f32 %v803, %v772
        %v829 = vadd.f32 %v803, %v773
        %v830 = vadd.f32 %v808, %v774
        %v831 = vadd.f32 %v808, %v775
        %v832 = vadd.f32 %v813, %v776
        %v833 = vadd.f32 %v813, %v777
        %v834 = vadd.f32 %v818, %v778
        %v835 = vadd.f32 %v818, %v779
        %836 = vset.pattern.permute.xlu0 1
        %837 = vperm.xlu0 %836, %v672
        %v838 = vpop.permute.xlu0 %837
        %840 = vset.pattern.permute.xlu0 1
        %841 = vperm.xlu0 %840, %v673
        %v842 = vpop.permute.xlu0 %841
        %844 = vset.pattern.permute.xlu0 1
        %845 = vperm.xlu0 %844, %v674
        %v846 = vpop.permute.xlu0 %845
        %848 = vset.pattern.permute.xlu0 1
        %849 = vperm.xlu0 %848, %v675
        %v850 = vpop.permute.xlu0 %849
        %852 = vset.pattern.permute.xlu0 1
        %853 = vperm.xlu0 %852, %v676
        %v854 = vpop.permute.xlu0 %853
        %856 = vset.pattern.permute.xlu0 1
        %857 = vperm.xlu0 %856, %v677
        %v858 = vpop.permute.xlu0 %857
        %860 = vset.pattern.permute.xlu0 1
        %861 = vperm.xlu0 %860, %v678
        %v862 = vpop.permute.xlu0 %861
        %864 = vset.pattern.permute.xlu0 1
        %865 = vperm.xlu0 %864, %v679
        %v866 = vpop.permute.xlu0 %865
        %v868 = vlaneseq
        %v869 = vshrl.u32 %v868, 7
        %v870 = vsub.s32 1, %v869
        %v871 = vrot.slane %v704, %v870
        %v872 = vlaneseq
        %v873 = vshrl.u32 %v872, 7
        %v874 = vsub.s32 5, %v873
        %v875 = vrot.slane %v704, %v874
        %v878 = vlaneseq
        %v879 = vshrl.u32 %v878, 7
        %v880 = vsub.s32 1, %v879
        %v881 = vrot.slane %v871, %v880
        %v882 = vlaneseq
        %v883 = vshrl.u32 %v882, 7
        %v884 = vsub.s32 1, %v883
        %v885 = vrot.slane %v875, %v884
        %v886 = vmul.f32 %v838, %v881
        %v887 = vmul.f32 %v838, %v885
        %v888 = vmul.f32 %v842, %v881
        %v889 = vmul.f32 %v842, %v885
        %v890 = vmul.f32 %v846, %v881
        %v891 = vmul.f32 %v846, %v885
        %v892 = vmul.f32 %v850, %v881
        %v893 = vmul.f32 %v850, %v885
        %v894 = vmul.f32 %v854, %v881
        %v895 = vmul.f32 %v854, %v885
        %v896 = vmul.f32 %v858, %v881
        %v897 = vmul.f32 %v858, %v885
        %v898 = vmul.f32 %v862, %v881
        %v899 = vmul.f32 %v862, %v885
        %v900 = vmul.f32 %v866, %v881
        %v901 = vmul.f32 %v866, %v885
        %v902 = vadd.f32 %v820, %v886
        %v903 = vadd.f32 %v821, %v887
        %v904 = vadd.f32 %v822, %v888
        %v905 = vadd.f32 %v823, %v889
        %v906 = vadd.f32 %v824, %v890
        %v907 = vadd.f32 %v825, %v891
        %v908 = vadd.f32 %v826, %v892
        %v909 = vadd.f32 %v827, %v893
        %v910 = vadd.f32 %v828, %v894
        %v911 = vadd.f32 %v829, %v895
        %v912 = vadd.f32 %v830, %v896
        %v913 = vadd.f32 %v831, %v897
        %v914 = vadd.f32 %v832, %v898
        %v915 = vadd.f32 %v833, %v899
        %v916 = vadd.f32 %v834, %v900
        %v917 = vadd.f32 %v835, %v901
        %918 = vset.pattern.permute.xlu0 2
        %919 = vperm.xlu0 %918, %v672
        %v920 = vpop.permute.xlu0 %919
        %922 = vset.pattern.permute.xlu0 2
        %923 = vperm.xlu0 %922, %v673
        %v924 = vpop.permute.xlu0 %923
        %926 = vset.pattern.permute.xlu0 2
        %927 = vperm.xlu0 %926, %v674
        %v928 = vpop.permute.xlu0 %927
        %930 = vset.pattern.permute.xlu0 2
        %931 = vperm.xlu0 %930, %v675
        %v932 = vpop.permute.xlu0 %931
        %934 = vset.pattern.permute.xlu0 2
        %935 = vperm.xlu0 %934, %v676
        %v936 = vpop.permute.xlu0 %935
        %938 = vset.pattern.permute.xlu0 2
        %939 = vperm.xlu0 %938, %v677
        %v940 = vpop.permute.xlu0 %939
        %942 = vset.pattern.permute.xlu0 2
        %943 = vperm.xlu0 %942, %v678
        %v944 = vpop.permute.xlu0 %943
        %946 = vset.pattern.permute.xlu0 2
        %947 = vperm.xlu0 %946, %v679
        %v948 = vpop.permute.xlu0 %947
        %v950 = vlaneseq
        %v951 = vshrl.u32 %v950, 7
        %v952 = vsub.s32 2, %v951
        %v953 = vrot.slane %v704, %v952
        %v954 = vlaneseq
        %v955 = vshrl.u32 %v954, 7
        %v956 = vsub.s32 6, %v955
        %v957 = vrot.slane %v704, %v956
        %v960 = vlaneseq
        %v961 = vshrl.u32 %v960, 7
        %v962 = vsub.s32 2, %v961
        %v963 = vrot.slane %v953, %v962
        %v964 = vlaneseq
        %v965 = vshrl.u32 %v964, 7
        %v966 = vsub.s32 2, %v965
        %v967 = vrot.slane %v957, %v966
        %v968 = vmul.f32 %v920, %v963
        %v969 = vmul.f32 %v920, %v967
        %v970 = vmul.f32 %v924, %v963
        %v971 = vmul.f32 %v924, %v967
        %v972 = vmul.f32 %v928, %v963
        %v973 = vmul.f32 %v928, %v967
        %v974 = vmul.f32 %v932, %v963
        %v975 = vmul.f32 %v932, %v967
        %v976 = vmul.f32 %v936, %v963
        %v977 = vmul.f32 %v936, %v967
        %v978 = vmul.f32 %v940, %v963
        %v979 = vmul.f32 %v940, %v967
        %v980 = vmul.f32 %v944, %v963
        %v981 = vmul.f32 %v944, %v967
        %v982 = vmul.f32 %v948, %v963
        %v983 = vmul.f32 %v948, %v967
        %v984 = vadd.f32 %v902, %v968
        %v985 = vadd.f32 %v903, %v969
        %v986 = vadd.f32 %v904, %v970
        %v987 = vadd.f32 %v905, %v971
        %v988 = vadd.f32 %v906, %v972
        %v989 = vadd.f32 %v907, %v973
        %v990 = vadd.f32 %v908, %v974
        %v991 = vadd.f32 %v909, %v975
        %v992 = vadd.f32 %v910, %v976
        %v993 = vadd.f32 %v911, %v977
        %v994 = vadd.f32 %v912, %v978
        %v995 = vadd.f32 %v913, %v979
        %v996 = vadd.f32 %v914, %v980
        %v997 = vadd.f32 %v915, %v981
        %v998 = vadd.f32 %v916, %v982
        %v999 = vadd.f32 %v917, %v983
        %v1000 = vmax.f32 %v984, 0.0
        %v1001 = vmax.f32 %v985, 0.0
        %v1002 = vmax.f32 %v986, 0.0
        %v1003 = vmax.f32 %v987, 0.0
        %v1004 = vmax.f32 %v988, 0.0
        %v1005 = vmax.f32 %v989, 0.0
        %v1006 = vmax.f32 %v990, 0.0
        %v1007 = vmax.f32 %v991, 0.0
        %v1008 = vmax.f32 %v992, 0.0
        %v1009 = vmax.f32 %v993, 0.0
        %v1010 = vmax.f32 %v994, 0.0
        %v1011 = vmax.f32 %v995, 0.0
        %v1012 = vmax.f32 %v996, 0.0
        %v1013 = vmax.f32 %v997, 0.0
        %v1014 = vmax.f32 %v998, 0.0
        %v1015 = vmax.f32 %v999, 0.0
        %v1016 = vpack.c.bf16 %v1002, %v1000
        %v1017 = vpack.c.bf16 %v1003, %v1001
        %v1018 = vpack.c.bf16 %v1006, %v1004
        %v1019 = vpack.c.bf16 %v1007, %v1005
        %v1020 = vpack.c.bf16 %v1010, %v1008
        %v1021 = vpack.c.bf16 %v1011, %v1009
        %v1022 = vpack.c.bf16 %v1014, %v1012
        %v1023 = vpack.c.bf16 %v1015, %v1013
        %1025 = vset.pattern.permute.xlu0 0
        %1026 = vperm.xlu0 %1025, %v696
        %v1027 = vpop.permute.xlu0 %1026
        %1030 = vset.pattern.permute.xlu0 0
        %1031 = vperm.xlu0 %1030, %v697
        %v1032 = vpop.permute.xlu0 %1031
        %1035 = vset.pattern.permute.xlu0 0
        %1036 = vperm.xlu0 %1035, %v698
        %v1037 = vpop.permute.xlu0 %1036
        %1040 = vset.pattern.permute.xlu0 0
        %1041 = vperm.xlu0 %1040, %v699
        %v1042 = vpop.permute.xlu0 %1041
        %1045 = vset.pattern.permute.xlu0 0
        %1046 = vperm.xlu0 %1045, %v700
        %v1047 = vpop.permute.xlu0 %1046
        %1050 = vset.pattern.permute.xlu0 0
        %1051 = vperm.xlu0 %1050, %v701
        %v1052 = vpop.permute.xlu0 %1051
        %1055 = vset.pattern.permute.xlu0 0
        %1056 = vperm.xlu0 %1055, %v702
        %v1057 = vpop.permute.xlu0 %1056
        %1060 = vset.pattern.permute.xlu0 0
        %1061 = vperm.xlu0 %1060, %v703
        %v1062 = vpop.permute.xlu0 %1061
        %v1072 = vunpack.c.l.b16 %v688
        %v1073 = vunpack.c.l.b16 %v689
        %v1074 = vunpack.c.l.b16 %v690
        %v1075 = vunpack.c.l.b16 %v691
        %v1076 = vunpack.c.l.b16 %v692
        %v1077 = vunpack.c.l.b16 %v693
        %v1078 = vunpack.c.l.b16 %v694
        %v1079 = vunpack.c.l.b16 %v695
        %v1080 = vpack.c.b16 %v1073, %v1072
        %v1081 = vpack.c.b16 %v1075, %v1074
        %v1082 = vpack.c.b16 %v1077, %v1076
        %v1083 = vpack.c.b16 %v1079, %v1078
        %vm1084 = vcmask 523264
        %v1086 = vsel %vm1084, %v1080, 0
        %v1089 = vsel %vm1084, %v1081, 0
        %v1092 = vsel %vm1084, %v1082, 0
        %v1095 = vsel %vm1084, %v1083, 0
        %1097 = vmatprep.subr.bf16.mxu0 %v1017
        %1098 = vmatpush1.bf16.msra.mxu0 %v1016
        %1099 = vmatprep.subr.bf16.mxu0 %v1019
        %1100 = vmatpush1.bf16.msra.mxu0 %v1018
        %1101 = vmatprep.subr.bf16.mxu0 %v1021
        %1102 = vmatpush1.bf16.msra.mxu0 %v1020
        %1103 = vmatprep.subr.bf16.mxu0 %v1023
        %1104 = vmatpush1.bf16.msra.mxu0 %v1022
        %1105 = vmatprep.subr.bf16.mxu0 0
        %1106 = vmatpush1.bf16.msra.mxu0 0
        %1107 = vmatprep.subr.bf16.mxu0 0
        %1108 = vmatpush1.bf16.msra.mxu0 0
        %1109 = vmatprep.subr.bf16.mxu0 0
        %1110 = vmatpush1.bf16.msra.mxu0 0
        %1111 = vmatprep.subr.bf16.mxu0 0
        %1112 = vmatpush1.bf16.msra.mxu0 0
        %1113 = vmatprep.subr.bf16.mxu0 0
        %1114 = vmatpush1.bf16.msra.mxu0 0
        %1115 = vmatprep.subr.bf16.mxu0 0
        %1116 = vmatpush1.bf16.msra.mxu0 0
        %1117 = vmatprep.subr.bf16.mxu0 0
        %1118 = vmatpush1.bf16.msra.mxu0 0
        %1119 = vmatprep.subr.bf16.mxu0 0
        %1120 = vmatpush1.bf16.msra.mxu0 0
        %1121 = vmatprep.subr.bf16.mxu0 0
        %1122 = vmatpush1.bf16.msra.mxu0 0
        %1123 = vmatprep.subr.bf16.mxu0 0
        %1124 = vmatpush1.bf16.msra.mxu0 0
        %1125 = vmatprep.subr.bf16.mxu0 0
        %1126 = vmatpush1.bf16.msra.mxu0 0
        %1127 = vmatprep.subr.bf16.mxu0 0
        %1128 = vmatpush1.bf16.msra.mxu0 0
        %1129 = vmatprep.mubr.bf16.mxu0 0
        %1130 = vmatmul.mubr.bf16.gmra.mrb[0].mxu0 %v1086
        %v1131 = vpop.f32.mrb[0].mxu0
        %v1132 = vadd.f32 %v1027, %v1131
        %v1133 = vpop.f32.mrb[0].mxu0
        %v1134 = vadd.f32 %v1027, %v1133
        %v1135 = vpop.f32.mrb[0].mxu0
        %v1136 = vadd.f32 %v1032, %v1135
        %v1137 = vpop.f32.mrb[0].mxu0
        %v1138 = vadd.f32 %v1032, %v1137
        %1139 = vmatprep.mubr.bf16.mxu0 0
        %1140 = vmatmul.mubr.bf16.gmra.mrb[0].mxu0 %v1089
        %v1141 = vpop.f32.mrb[0].mxu0
        %v1142 = vadd.f32 %v1037, %v1141
        %v1143 = vpop.f32.mrb[0].mxu0
        %v1144 = vadd.f32 %v1037, %v1143
        %v1145 = vpop.f32.mrb[0].mxu0
        %v1146 = vadd.f32 %v1042, %v1145
        %v1147 = vpop.f32.mrb[0].mxu0
        %v1148 = vadd.f32 %v1042, %v1147
        %1149 = vmatprep.mubr.bf16.mxu0 0
        %1150 = vmatmul.mubr.bf16.gmra.mrb[0].mxu0 %v1092
        %v1151 = vpop.f32.mrb[0].mxu0
        %v1152 = vadd.f32 %v1047, %v1151
        %v1153 = vpop.f32.mrb[0].mxu0
        %v1154 = vadd.f32 %v1047, %v1153
        %v1155 = vpop.f32.mrb[0].mxu0
        %v1156 = vadd.f32 %v1052, %v1155
        %v1157 = vpop.f32.mrb[0].mxu0
        %v1158 = vadd.f32 %v1052, %v1157
        %1159 = vmatprep.mubr.bf16.mxu0 0
        %1160 = vmatmul.mubr.bf16.gmra.mrb[0].mxu0 %v1095
        %v1161 = vpop.f32.mrb[0].mxu0
        %v1162 = vadd.f32 %v1057, %v1161
        %v1163 = vpop.f32.mrb[0].mxu0
        %v1164 = vadd.f32 %v1057, %v1163
        %v1165 = vpop.f32.mrb[0].mxu0
        %v1166 = vadd.f32 %v1062, %v1165
        %v1167 = vpop.f32.mrb[0].mxu0
        %v1168 = vadd.f32 %v1062, %v1167
        %1169 = vdwg.mxu0
        %v1170 = vmax.f32 %v1132, 0.0
        %v1171 = vmax.f32 %v1134, 0.0
        %v1172 = vmax.f32 %v1136, 0.0
        %v1173 = vmax.f32 %v1138, 0.0
        %v1174 = vmax.f32 %v1142, 0.0
        %v1175 = vmax.f32 %v1144, 0.0
        %v1176 = vmax.f32 %v1146, 0.0
        %v1177 = vmax.f32 %v1148, 0.0
        %v1178 = vmax.f32 %v1152, 0.0
        %v1179 = vmax.f32 %v1154, 0.0
        %v1180 = vmax.f32 %v1156, 0.0
        %v1181 = vmax.f32 %v1158, 0.0
        %v1182 = vmax.f32 %v1162, 0.0
        %v1183 = vmax.f32 %v1164, 0.0
        %v1184 = vmax.f32 %v1166, 0.0
        %v1185 = vmax.f32 %v1168, 0.0
        %1186 = vst [vmem:[%s658] sm:$0xff] %v1170
        %1187 = vst [vmem:[%s658 + $0x8] sm:$0xff] %v1171
        %1188 = vst [vmem:[%s658 + $0x10] sm:$0xff] %v1172
        %1189 = vst [vmem:[%s658 + $0x18] sm:$0xff] %v1173
        %1190 = vst [vmem:[%s658 + $0x20] sm:$0xff] %v1174
        %1191 = vst [vmem:[%s658 + $0x28] sm:$0xff] %v1175
        %1192 = vst [vmem:[%s658 + $0x30] sm:$0xff] %v1176
        %1193 = vst [vmem:[%s658 + $0x38] sm:$0xff] %v1177
        %1194 = vst [vmem:[%s658 + $0x40] sm:$0xff] %v1178
        %1195 = vst [vmem:[%s658 + $0x48] sm:$0xff] %v1179
        %1196 = vst [vmem:[%s658 + $0x50] sm:$0xff] %v1180
        %1197 = vst [vmem:[%s658 + $0x58] sm:$0xff] %v1181
        %1198 = vst [vmem:[%s658 + $0x60] sm:$0xff] %v1182
        %1199 = vst [vmem:[%s658 + $0x68] sm:$0xff] %v1183
        %1200 = vst [vmem:[%s658 + $0x70] sm:$0xff] %v1184
        %1201 = vst [vmem:[%s658 + $0x78] sm:$0xff] %v1185
        %s1202 = scalar_lea.vmem %s634, 8 [#allocation2]
        %v1203 = vld [vmem:[%s1202] sm:$0x77]
        %v1205 = vlaneseq
        %v1206 = vshrl.u32 %v1205, 7
        %v1207 = vsub.s32 0, %v1206
        %v1208 = vrot.slane %v1203, %v1207
        %v1209 = vlaneseq
        %v1210 = vshrl.u32 %v1209, 7
        %v1211 = vsub.s32 4, %v1210
        %v1212 = vrot.slane %v1203, %v1211
        %v1215 = vlaneseq
        %v1216 = vshrl.u32 %v1215, 7
        %v1217 = vsub.s32 0, %v1216
        %v1218 = vrot.slane %v1208, %v1217
        %v1219 = vlaneseq
        %v1220 = vshrl.u32 %v1219, 7
        %v1221 = vsub.s32 0, %v1220
        %v1222 = vrot.slane %v1212, %v1221
        %v1223 = vmul.f32 %v708, %v1218
        %v1224 = vmul.f32 %v708, %v1222
        %v1225 = vmul.f32 %v713, %v1218
        %v1226 = vmul.f32 %v713, %v1222
        %v1227 = vmul.f32 %v718, %v1218
        %v1228 = vmul.f32 %v718, %v1222
        %v1229 = vmul.f32 %v723, %v1218
        %v1230 = vmul.f32 %v723, %v1222
        %v1231 = vmul.f32 %v728, %v1218
        %v1232 = vmul.f32 %v728, %v1222
        %v1233 = vmul.f32 %v733, %v1218
        %v1234 = vmul.f32 %v733, %v1222
        %v1235 = vmul.f32 %v738, %v1218
        %v1236 = vmul.f32 %v738, %v1222
        %v1237 = vmul.f32 %v743, %v1218
        %v1238 = vmul.f32 %v743, %v1222
        %v1239 = vadd.f32 %v783, %v1223
        %v1240 = vadd.f32 %v783, %v1224
        %v1241 = vadd.f32 %v788, %v1225
        %v1242 = vadd.f32 %v788, %v1226
        %v1243 = vadd.f32 %v793, %v1227
        %v1244 = vadd.f32 %v793, %v1228
        %v1245 = vadd.f32 %v798, %v1229
        %v1246 = vadd.f32 %v798, %v1230
        %v1247 = vadd.f32 %v803, %v1231
        %v1248 = vadd.f32 %v803, %v1232
        %v1249 = vadd.f32 %v808, %v1233
        %v1250 = vadd.f32 %v808, %v1234
        %v1251 = vadd.f32 %v813, %v1235
        %v1252 = vadd.f32 %v813, %v1236
        %v1253 = vadd.f32 %v818, %v1237
        %v1254 = vadd.f32 %v818, %v1238
        %v1255 = vlaneseq
        %v1256 = vshrl.u32 %v1255, 7
        %v1257 = vsub.s32 1, %v1256
        %v1258 = vrot.slane %v1203, %v1257
        %v1259 = vlaneseq
        %v1260 = vshrl.u32 %v1259, 7
        %v1261 = vsub.s32 5, %v1260
        %v1262 = vrot.slane %v1203, %v1261
        %v1265 = vlaneseq
        %v1266 = vshrl.u32 %v1265, 7
        %v1267 = vsub.s32 1, %v1266
        %v1268 = vrot.slane %v1258, %v1267
        %v1269 = vlaneseq
        %v1270 = vshrl.u32 %v1269, 7
        %v1271 = vsub.s32 1, %v1270
        %v1272 = vrot.slane %v1262, %v1271
        %v1273 = vmul.f32 %v838, %v1268
        %v1274 = vmul.f32 %v838, %v1272
        %v1275 = vmul.f32 %v842, %v1268
        %v1276 = vmul.f32 %v842, %v1272
        %v1277 = vmul.f32 %v846, %v1268
        %v1278 = vmul.f32 %v846, %v1272
        %v1279 = vmul.f32 %v850, %v1268
        %v1280 = vmul.f32 %v850, %v1272
        %v1281 = vmul.f32 %v854, %v1268
        %v1282 = vmul.f32 %v854, %v1272
        %v1283 = vmul.f32 %v858, %v1268
        %v1284 = vmul.f32 %v858, %v1272
        %v1285 = vmul.f32 %v862, %v1268
        %v1286 = vmul.f32 %v862, %v1272
        %v1287 = vmul.f32 %v866, %v1268
        %v1288 = vmul.f32 %v866, %v1272
        %v1289 = vadd.f32 %v1239, %v1273
        %v1290 = vadd.f32 %v1240, %v1274
        %v1291 = vadd.f32 %v1241, %v1275
        %v1292 = vadd.f32 %v1242, %v1276
        %v1293 = vadd.f32 %v1243, %v1277
        %v1294 = vadd.f32 %v1244, %v1278
        %v1295 = vadd.f32 %v1245, %v1279
        %v1296 = vadd.f32 %v1246, %v1280
        %v1297 = vadd.f32 %v1247, %v1281
        %v1298 = vadd.f32 %v1248, %v1282
        %v1299 = vadd.f32 %v1249, %v1283
        %v1300 = vadd.f32 %v1250, %v1284
        %v1301 = vadd.f32 %v1251, %v1285
        %v1302 = vadd.f32 %v1252, %v1286
        %v1303 = vadd.f32 %v1253, %v1287
        %v1304 = vadd.f32 %v1254, %v1288
        %v1305 = vlaneseq
        %v1306 = vshrl.u32 %v1305, 7
        %v1307 = vsub.s32 2, %v1306
        %v1308 = vrot.slane %v1203, %v1307
        %v1309 = vlaneseq
        %v1310 = vshrl.u32 %v1309, 7
        %v1311 = vsub.s32 6, %v1310
        %v1312 = vrot.slane %v1203, %v1311
        %v1315 = vlaneseq
        %v1316 = vshrl.u32 %v1315, 7
        %v1317 = vsub.s32 2, %v1316
        %v1318 = vrot.slane %v1308, %v1317
        %v1319 = vlaneseq
        %v1320 = vshrl.u32 %v1319, 7
        %v1321 = vsub.s32 2, %v1320
        %v1322 = vrot.slane %v1312, %v1321
        %v1323 = vmul.f32 %v920, %v1318
        %v1324 = vmul.f32 %v920, %v1322
        %v1325 = vmul.f32 %v924, %v1318
        %v1326 = vmul.f32 %v924, %v1322
        %v1327 = vmul.f32 %v928, %v1318
        %v1328 = vmul.f32 %v928, %v1322
        %v1329 = vmul.f32 %v932, %v1318
        %v1330 = vmul.f32 %v932, %v1322
        %v1331 = vmul.f32 %v936, %v1318
        %v1332 = vmul.f32 %v936, %v1322
        %v1333 = vmul.f32 %v940, %v1318
        %v1334 = vmul.f32 %v940, %v1322
        %v1335 = vmul.f32 %v944, %v1318
        %v1336 = vmul.f32 %v944, %v1322
        %v1337 = vmul.f32 %v948, %v1318
        %v1338 = vmul.f32 %v948, %v1322
        %v1339 = vadd.f32 %v1289, %v1323
        %v1340 = vadd.f32 %v1290, %v1324
        %v1341 = vadd.f32 %v1291, %v1325
        %v1342 = vadd.f32 %v1292, %v1326
        %v1343 = vadd.f32 %v1293, %v1327
        %v1344 = vadd.f32 %v1294, %v1328
        %v1345 = vadd.f32 %v1295, %v1329
        %v1346 = vadd.f32 %v1296, %v1330
        %v1347 = vadd.f32 %v1297, %v1331
        %v1348 = vadd.f32 %v1298, %v1332
        %v1349 = vadd.f32 %v1299, %v1333
        %v1350 = vadd.f32 %v1300, %v1334
        %v1351 = vadd.f32 %v1301, %v1335
        %v1352 = vadd.f32 %v1302, %v1336
        %v1353 = vadd.f32 %v1303, %v1337
        %v1354 = vadd.f32 %v1304, %v1338
        %v1355 = vmax.f32 %v1339, 0.0
        %v1356 = vmax.f32 %v1340, 0.0
        %v1357 = vmax.f32 %v1341, 0.0
        %v1358 = vmax.f32 %v1342, 0.0
        %v1359 = vmax.f32 %v1343, 0.0
        %v1360 = vmax.f32 %v1344, 0.0
        %v1361 = vmax.f32 %v1345, 0.0
        %v1362 = vmax.f32 %v1346, 0.0
        %v1363 = vmax.f32 %v1347, 0.0
        %v1364 = vmax.f32 %v1348, 0.0
        %v1365 = vmax.f32 %v1349, 0.0
        %v1366 = vmax.f32 %v1350, 0.0
        %v1367 = vmax.f32 %v1351, 0.0
        %v1368 = vmax.f32 %v1352, 0.0
        %v1369 = vmax.f32 %v1353, 0.0
        %v1370 = vmax.f32 %v1354, 0.0
        %v1371 = vpack.c.bf16 %v1357, %v1355
        %v1372 = vpack.c.bf16 %v1358, %v1356
        %v1373 = vpack.c.bf16 %v1361, %v1359
        %v1374 = vpack.c.bf16 %v1362, %v1360
        %v1375 = vpack.c.bf16 %v1365, %v1363
        %v1376 = vpack.c.bf16 %v1366, %v1364
        %v1377 = vpack.c.bf16 %v1369, %v1367
        %v1378 = vpack.c.bf16 %v1370, %v1368
        %1379 = vmatprep.subr.bf16.mxu0 %v1372
        %1380 = vmatpush1.bf16.msra.mxu0 %v1371
        %1381 = vmatprep.subr.bf16.mxu0 %v1374
        %1382 = vmatpush1.bf16.msra.mxu0 %v1373
        %1383 = vmatprep.subr.bf16.mxu0 %v1376
        %1384 = vmatpush1.bf16.msra.mxu0 %v1375
        %1385 = vmatprep.subr.bf16.mxu0 %v1378
        %1386 = vmatpush1.bf16.msra.mxu0 %v1377
        %1387 = vmatprep.subr.bf16.mxu0 0
        %1388 = vmatpush1.bf16.msra.mxu0 0
        %1389 = vmatprep.subr.bf16.mxu0 0
        %1390 = vmatpush1.bf16.msra.mxu0 0
        %1391 = vmatprep.subr.bf16.mxu0 0
        %1392 = vmatpush1.bf16.msra.mxu0 0
        %1393 = vmatprep.subr.bf16.mxu0 0
        %1394 = vmatpush1.bf16.msra.mxu0 0
        %1395 = vmatprep.subr.bf16.mxu0 0
        %1396 = vmatpush1.bf16.msra.mxu0 0
        %1397 = vmatprep.subr.bf16.mxu0 0
        %1398 = vmatpush1.bf16.msra.mxu0 0
        %1399 = vmatprep.subr.bf16.mxu0 0
        %1400 = vmatpush1.bf16.msra.mxu0 0
        %1401 = vmatprep.subr.bf16.mxu0 0
        %1402 = vmatpush1.bf16.msra.mxu0 0
        %1403 = vmatprep.subr.bf16.mxu0 0
        %1404 = vmatpush1.bf16.msra.mxu0 0
        %1405 = vmatprep.subr.bf16.mxu0 0
        %1406 = vmatpush1.bf16.msra.mxu0 0
        %1407 = vmatprep.subr.bf16.mxu0 0
        %1408 = vmatpush1.bf16.msra.mxu0 0
        %1409 = vmatprep.subr.bf16.mxu0 0
        %1410 = vmatpush1.bf16.msra.mxu0 0
        %1411 = vmatprep.mubr.bf16.mxu0 0
        %1412 = vmatmul.mubr.bf16.gmra.mrb[0].mxu0 %v1086
        %v1413 = vpop.f32.mrb[0].mxu0
        %v1414 = vadd.f32 %v1027, %v1413
        %v1415 = vpop.f32.mrb[0].mxu0
        %v1416 = vadd.f32 %v1027, %v1415
        %v1417 = vpop.f32.mrb[0].mxu0
        %v1418 = vadd.f32 %v1032, %v1417
        %v1419 = vpop.f32.mrb[0].mxu0
        %v1420 = vadd.f32 %v1032, %v1419
        %1421 = vmatprep.mubr.bf16.mxu0 0
        %1422 = vmatmul.mubr.bf16.gmra.mrb[0].mxu0 %v1089
        %v1423 = vpop.f32.mrb[0].mxu0
        %v1424 = vadd.f32 %v1037, %v1423
        %v1425 = vpop.f32.mrb[0].mxu0
        %v1426 = vadd.f32 %v1037, %v1425
        %v1427 = vpop.f32.mrb[0].mxu0
        %v1428 = vadd.f32 %v1042, %v1427
        %v1429 = vpop.f32.mrb[0].mxu0
        %v1430 = vadd.f32 %v1042, %v1429
        %1431 = vmatprep.mubr.bf16.mxu0 0
        %1432 = vmatmul.mubr.bf16.gmra.mrb[0].mxu0 %v1092
        %v1433 = vpop.f32.mrb[0].mxu0
        %v1434 = vadd.f32 %v1047, %v1433
        %v1435 = vpop.f32.mrb[0].mxu0
        %v1436 = vadd.f32 %v1047, %v1435
        %v1437 = vpop.f32.mrb[0].mxu0
        %v1438 = vadd.f32 %v1052, %v1437
        %v1439 = vpop.f32.mrb[0].mxu0
        %v1440 = vadd.f32 %v1052, %v1439
        %1441 = vmatprep.mubr.bf16.mxu0 0
        %1442 = vmatmul.mubr.bf16.gmra.mrb[0].mxu0 %v1095
        %v1443 = vpop.f32.mrb[0].mxu0
        %v1444 = vadd.f32 %v1057, %v1443
        %v1445 = vpop.f32.mrb[0].mxu0
        %v1446 = vadd.f32 %v1057, %v1445
        %v1447 = vpop.f32.mrb[0].mxu0
        %v1448 = vadd.f32 %v1062, %v1447
        %v1449 = vpop.f32.mrb[0].mxu0
        %v1450 = vadd.f32 %v1062, %v1449
        %1451 = vdwg.mxu0
        %v1452 = vmax.f32 %v1414, 0.0
        %v1453 = vmax.f32 %v1416, 0.0
        %v1454 = vmax.f32 %v1418, 0.0
        %v1455 = vmax.f32 %v1420, 0.0
        %v1456 = vmax.f32 %v1424, 0.0
        %v1457 = vmax.f32 %v1426, 0.0
        %v1458 = vmax.f32 %v1428, 0.0
        %v1459 = vmax.f32 %v1430, 0.0
        %v1460 = vmax.f32 %v1434, 0.0
        %v1461 = vmax.f32 %v1436, 0.0
        %v1462 = vmax.f32 %v1438, 0.0
        %v1463 = vmax.f32 %v1440, 0.0
        %v1464 = vmax.f32 %v1444, 0.0
        %v1465 = vmax.f32 %v1446, 0.0
        %v1466 = vmax.f32 %v1448, 0.0
        %v1467 = vmax.f32 %v1450, 0.0
        %s1468 = scalar_lea.vmem %s658, 128 [#allocation3]
        %1469 = vst [vmem:[%s1468] sm:$0xff] %v1452
        %1470 = vst [vmem:[%s1468 + $0x8] sm:$0xff] %v1453
        %1471 = vst [vmem:[%s1468 + $0x10] sm:$0xff] %v1454
        %1472 = vst [vmem:[%s1468 + $0x18] sm:$0xff] %v1455
        %1473 = vst [vmem:[%s1468 + $0x20] sm:$0xff] %v1456
        %1474 = vst [vmem:[%s1468 + $0x28] sm:$0xff] %v1457
        %1475 = vst [vmem:[%s1468 + $0x30] sm:$0xff] %v1458
        %1476 = vst [vmem:[%s1468 + $0x38] sm:$0xff] %v1459
        %1477 = vst [vmem:[%s1468 + $0x40] sm:$0xff] %v1460
        %1478 = vst [vmem:[%s1468 + $0x48] sm:$0xff] %v1461
        %1479 = vst [vmem:[%s1468 + $0x50] sm:$0xff] %v1462
        %1480 = vst [vmem:[%s1468 + $0x58] sm:$0xff] %v1463
        %1481 = vst [vmem:[%s1468 + $0x60] sm:$0xff] %v1464
        %1482 = vst [vmem:[%s1468 + $0x68] sm:$0xff] %v1465
        %1483 = vst [vmem:[%s1468 + $0x70] sm:$0xff] %v1466
        %1484 = vst [vmem:[%s1468 + $0x78] sm:$0xff] %v1467
        %s1485 = sand.u32 %s153, 1
        %s1486 = scalar_lea.sflag [#allocation4], %s1485
        %s1487 = sand.u32 %s153, 1
        %s1488 = smul.addr %s1487, 256
        %s1489 = scalar_lea.vmem [#allocation3], %s1488
        // Predicated region
        $region107: #{tpu_custom_call.1} parent=101 // pred_check
          %p1490 = pneg %p163
        $region108: #{tpu_custom_call.1} parent=101 // pred_check_branch
          %1492 = sbr.rel (%p1490) target = $region110
        $region109: #{tpu_custom_call.1} parent=101 // pred_region
          %s1493 = smul.u32 2, %s23
          %s1494 = smul.u32 2, %s24
          %s1495 = ssub.s32 3, %s1494
          %p1496 = scmp.lt.s32.totalorder %s1495, 2
          %s1497 = scalar_select %p1496, %s1495, 2
          %s1498 = smul.u32 2048, %s1497
          %s1500 = ssub.s32 4096, %s1498
          %1501 = vsyncadd %s1486, %s1500
          %p1502 = scmp.ne.s32.totalorder 0, %s1498
          %s1503 = smul.addr %s1493, 24
          %s1504 = sadd.s32 %s1494, %s1503
          %s1505 = smul.addr %s1504, 128
          %s1506 = scalar_lea.hbm %s5, %s1505
          %s1507 = smul.u32 %s1497, 8
          %s1508 = smul.u32 %s1507, 16
          %s1509 = sshll.u32 %s1489, 4
          %s1510 = int_to_ptr.vmem [resolvable:$true] %s1509
          %s1511 = sshll.u32 %s1508, 4
          %1515 = dma.vmem_to_hbm [thread:$0]  (%p1502), %s1510, %s1511, %s1506, %s1486, 256, 384, %s1507
        $region110: #{tpu_custom_call.1} parent=101 // pred_fallthru
          _
      $region102: #{tpu_custom_call.1} parent=5 // pred_fallthru
        _
      %p1516 = scmp.le.s32.totalorder 2, %s14
      // Predicated region
      $region111: #{tpu_custom_call.1} parent=5 // pred_check
        %p1517 = pneg %p1516
      $region112: #{tpu_custom_call.1} parent=5 // pred_check_branch
        %1519 = sbr.rel (%p1517) target = $region114
      $region113: #{tpu_custom_call.1} parent=5 // pred_region
        %s1520 = ssub.s32 %s14, 2
        // Predicated region
        $region115: #{tpu_custom_call.1} parent=113 // pred_check
          %p1521 = pneg %p169
        $region116: #{tpu_custom_call.1} parent=113 // pred_check_branch
          %1523 = sbr.rel (%p1521) target = $region118
        $region117: #{tpu_custom_call.1} parent=113 // pred_region
          %s1524 = sand.u32 %s154, 1
          %s1525 = scalar_lea.sflag [#allocation4], %s1524
          %s1526 = sand.u32 %s154, 1
          %s1527 = smul.addr %s1526, 256
          %s1528 = scalar_lea.vmem [#allocation3], %s1527
          %1529 = dma.done %s1525, 4096
        $region118: #{tpu_custom_call.1} parent=113 // pred_fallthru
          _
      $region114: #{tpu_custom_call.1} parent=5 // pred_fallthru
        _
    $region6: #{tpu_custom_call.1} parent=1 // loop_footer
      %s18 = sadd.s32 1, %s14
    $region7: #{tpu_custom_call.1} parent=1 // loop_footer_branch
      %13 = sbr.rel target = $region3
    $region8: #{tpu_custom_call.1} parent=1 // loop_exit
      _
    %1530 = vsyncpa [#allocation4], 1
    %s1531 = scalar_lea.sflag [#allocation4], 1
    %1532 = vsyncpa %s1531, 1

</llo_original>
